<compile_context>
chip_gen: v7x
topology: tpu7x:2x2x1
jax: 0.10.0
libtpu: 0.0.40
codegen_flags: <defaults>
</compile_context>

<pallas_src>
import functools

import jax
import jax.numpy as jnp
from jax.experimental import pallas as pl
from jax.experimental.pallas import tpu as pltpu

BN_EPS = 1e-5


# -----------------------------------------------------------------------------
# Kernel A/B: (optional fused BN-affine + ReLU on the input path) -> 3x3 same
# conv via rolled taps + one big-K bf16 MXU matmul -> bias -> bf16 output,
# plus per-batch-element partial BatchNorm statistics (f32).
# -----------------------------------------------------------------------------
def _conv_bn_stats_kernel(x_ref, s_ref, t_ref, w_ref, b_ref,
                          y_ref, sum_ref, sq_ref,
                          *, H, W, fuse_input_bn_relu):
    L = H * W

    a = x_ref[0].astype(jnp.float32)                         # (Cin, L)
    if fuse_input_bn_relu:
        # Previous layer's BatchNorm affine + ReLU fused onto this conv's
        # input path (per-channel scale/shift broadcast over lanes).
        a = jnp.maximum(a * s_ref[...] + t_ref[...], 0.0)

    # Flattened pixel coordinate p = h*W + w along lanes, for the boundary
    # masks that implement the implicit zero padding.
    pos = jax.lax.broadcasted_iota(jnp.int32, (1, L), 1)
    if W & (W - 1) == 0:
        w_pos = jnp.bitwise_and(pos, W - 1)                  # p % W (pow2 fast path)
    else:
        w_pos = pos % W

    # Build the 9 conv taps with lane rolls (XLU slot) + 0/1 masks (VPU slot).
    # No padded stage, no im2col scratch, no unaligned sublane copies.
    taps = []
    for dy in range(3):
        oy = dy - 1
        for dx in range(3):
            ox = dx - 1
            d = oy * W + ox                                  # source offset
            tap = a if d == 0 else pltpu.roll(a, shift=(L - d) % L, axis=1)
            conds = []
            if oy < 0:
                conds.append(pos >= W)                       # h - 1 >= 0
            elif oy > 0:
                conds.append(pos < (H - 1) * W)              # h + 1 <= H - 1
            if ox < 0:
                conds.append(w_pos >= 1)                     # w - 1 >= 0
            elif ox > 0:
                conds.append(w_pos < W - 1)                  # w + 1 <= W - 1
            if conds:
                valid = conds[0]
                for c in conds[1:]:
                    valid = jnp.logical_and(valid, c)
                tap = tap * valid.astype(jnp.float32)        # (1, L) broadcast
            taps.append(tap)

    # One big-K bf16 MXU matmul: (Cout, 9*Cin) x (9*Cin, L) -> f32 (Cout, L).
    col = jnp.concatenate(taps, axis=0).astype(jnp.bfloat16)
    y = jnp.dot(w_ref[...], col, preferred_element_type=jnp.float32)
    y = y + b_ref[...]                                       # conv bias (Cout, 1)

    y_ref[0] = y.astype(y_ref.dtype)                         # bf16 intermediate

    # Per-batch-element partial BatchNorm statistics (biased, kept in f32).
    sum_ref[0] = jnp.sum(y, axis=1, keepdims=True)
    sq_ref[0] = jnp.sum(y * y, axis=1, keepdims=True)


def conv_bn_stats(x_flat, scale, shift, w_t, bias, *, H, W, fuse_input_bn_relu):
    """3x3 same-conv of x_flat (N, Cin, H*W) + partial batch statistics.

    Returns (y_bf16 (N,Cout,H*W), partial_sum (N,Cout,1), partial_sumsq).
    If fuse_input_bn_relu, the input is first relu(x*scale + shift).
    """
    N, Cin, L = x_flat.shape
    Cout = w_t.shape[0]
    kernel = functools.partial(_conv_bn_stats_kernel, H=H, W=W,
                               fuse_input_bn_relu=fuse_input_bn_relu)
    return pl.pallas_call(
        kernel,
        out_shape=(jax.ShapeDtypeStruct((N, Cout, L), jnp.bfloat16),
                   jax.ShapeDtypeStruct((N, Cout, 1), jnp.float32),
                   jax.ShapeDtypeStruct((N, Cout, 1), jnp.float32)),
        grid=(N,),
        in_specs=[
            pl.BlockSpec((1, Cin, L), lambda n: (n, 0, 0)),
            pl.BlockSpec((Cin, 1), lambda n: (0, 0)),
            pl.BlockSpec((Cin, 1), lambda n: (0, 0)),
            pl.BlockSpec((Cout, 9 * Cin), lambda n: (0, 0)),
            pl.BlockSpec((Cout, 1), lambda n: (0, 0)),
        ],
        out_specs=(
            pl.BlockSpec((1, Cout, L), lambda n: (n, 0, 0)),
            pl.BlockSpec((1, Cout, 1), lambda n: (n, 0, 0)),
            pl.BlockSpec((1, Cout, 1), lambda n: (n, 0, 0)),
        ),
        # Stats are per-step partial outputs -> batch axis is fully parallel.
        compiler_params=pltpu.CompilerParams(
            dimension_semantics=("parallel",)),
    )(x_flat, scale, shift, w_t, bias)


# -----------------------------------------------------------------------------
# Kernel C: bn2-affine + ReLU computed once -> x_conv, then 2x2 max pool from
# the same registers (lane rolls + max, stride-2 decimation via 0/1 MXU matmul).
# -----------------------------------------------------------------------------
def _bn_relu_pool_kernel(y_ref, s_ref, t_ref, sel_ref, conv_ref, pool_ref,
                         *, H, W):
    L = H * W
    a = jnp.maximum(y_ref[0].astype(jnp.float32) * s_ref[...] + t_ref[...], 0.0)
    conv_ref[0] = a.astype(conv_ref.dtype)                   # x_conv (once)

    # Neighbor maxes via lane rolls; values at even (h, w) hold the 2x2 max.
    m1 = jnp.maximum(a, pltpu.roll(a, shift=L - 1, axis=1))    # right neighbor
    m2 = jnp.maximum(m1, pltpu.roll(m1, shift=L - W, axis=1))  # row below
    # Exact stride-2 decimation: 0/1 selection matrix on the (idle) MXU.
    pool_ref[0] = jnp.dot(m2, sel_ref[...],
                          preferred_element_type=jnp.float32).astype(pool_ref.dtype)


def bn_relu_maxpool(y_flat, scale, shift, *, H, W):
    N, C, L = y_flat.shape
    assert H % 2 == 0 and W % 2 == 0  # TODO(synk): MaxPool floor semantics for odd dims
    Hh, Wh = H // 2, W // 2
    Lp = Hh * Wh
    # Column (i*Wh + j) of `sel` selects flat pixel (2i*W + 2j).
    src = (2 * jnp.arange(Hh)[:, None] * W
           + 2 * jnp.arange(Wh)[None, :]).reshape(-1)        # (Lp,)
    sel = (jnp.arange(L)[:, None] == src[None, :]).astype(jnp.float32)  # (L, Lp)
    kernel = functools.partial(_bn_relu_pool_kernel, H=H, W=W)
    return pl.pallas_call(
        kernel,
        out_shape=(jax.ShapeDtypeStruct((N, C, L), jnp.float32),
                   jax.ShapeDtypeStruct((N, C, Lp), jnp.float32)),
        grid=(N,),
        in_specs=[
            pl.BlockSpec((1, C, L), lambda n: (n, 0, 0)),
            pl.BlockSpec((C, 1), lambda n: (0, 0)),
            pl.BlockSpec((C, 1), lambda n: (0, 0)),
            pl.BlockSpec((L, Lp), lambda n: (0, 0)),
        ],
        out_specs=(
            pl.BlockSpec((1, C, L), lambda n: (n, 0, 0)),
            pl.BlockSpec((1, C, Lp), lambda n: (n, 0, 0)),
        ),
        compiler_params=pltpu.CompilerParams(dimension_semantics=("parallel",)),
    )(y_flat, scale, shift, sel)


# -----------------------------------------------------------------------------
# Full Encoder forward (NCHW in, NCHW out — same as the PyTorch module).
# -----------------------------------------------------------------------------
def encoder_forward(x_nchw, params):
    N, Cin, H, W = x_nchw.shape
    L = H * W
    F = params["w1"].shape[-1]
    cnt = N * L

    # NCHW -> NCHW-flat is a free, layout-preserving reshape (no transpose).
    x_flat = x_nchw.reshape(N, Cin, L)

    # Weights pre-transposed to (Cout, 9*Cin) bf16 (tiny, one-time).
    w1_t = params["w1"].reshape(9 * Cin, F).T.astype(jnp.bfloat16)
    w2_t = params["w2"].reshape(9 * F, F).T.astype(jnp.bfloat16)
    b1 = params["b1"].reshape(F, 1)
    b2 = params["b2"].reshape(F, 1)

    # conv1 + bn1 partial batch stats (one fused pass over x).
    ones_c = jnp.ones((Cin, 1), jnp.float32)
    zeros_c = jnp.zeros((Cin, 1), jnp.float32)
    y1, s1, q1 = conv_bn_stats(x_flat, ones_c, zeros_c, w1_t, b1,
                               H=H, W=W, fuse_input_bn_relu=False)
    mean1 = jnp.sum(s1, axis=0)[:, 0] / cnt
    var1 = jnp.sum(q1, axis=0)[:, 0] / cnt - mean1 * mean1   # biased (BN train)
    scale1 = params["gamma1"] / jnp.sqrt(var1 + BN_EPS)
    shift1 = params["beta1"] - mean1 * scale1

    # bn1 + relu fused into conv2's input path, + bn2 partial batch stats.
    y2, s2, q2 = conv_bn_stats(y1, scale1.reshape(F, 1), shift1.reshape(F, 1),
                               w2_t, b2, H=H, W=W, fuse_input_bn_relu=True)
    mean2 = jnp.sum(s2, axis=0)[:, 0] / cnt
    var2 = jnp.sum(q2, axis=0)[:, 0] / cnt - mean2 * mean2
    scale2 = params["gamma2"] / jnp.sqrt(var2 + BN_EPS)
    shift2 = params["beta2"] - mean2 * scale2

    # bn2 + relu + 2x2 max pool, both outputs written directly by the kernel.
    x_conv_flat, x_pool_flat = bn_relu_maxpool(
        y2, scale2.reshape(F, 1), shift2.reshape(F, 1), H=H, W=W)

    return (x_conv_flat.reshape(N, F, H, W),
            x_pool_flat.reshape(N, F, H // 2, W // 2))


def init_params(key, num_channels, num_filters):
    k1, k2, k3, k4 = jax.random.split(key, 4)
    fan1 = num_channels * 9
    fan2 = num_filters * 9
    bd1 = 1.0 / (fan1 ** 0.5)
    bd2 = 1.0 / (fan2 ** 0.5)
    return {
        # conv weights stored HWIO (kh, kw, Cin, Cout)
        "w1": jax.random.uniform(k1, (3, 3, num_channels, num_filters),
                                 jnp.float32, -bd1, bd1),
        "b1": jax.random.uniform(k2, (num_filters,), jnp.float32, -bd1, bd1),
        "w2": jax.random.uniform(k3, (3, 3, num_filters, num_filters),
                                 jnp.float32, -bd2, bd2),
        "b2": jax.random.uniform(k4, (num_filters,), jnp.float32, -bd2, bd2),
        # BatchNorm2d defaults: weight=1, bias=0
        "gamma1": jnp.ones((num_filters,), jnp.float32),
        "beta1": jnp.zeros((num_filters,), jnp.float32),
        "gamma2": jnp.ones((num_filters,), jnp.float32),
        "beta2": jnp.zeros((num_filters,), jnp.float32),
    }


# Pure-JAX reference (mirrors the PyTorch forward) for correctness checking.
def reference_forward(x_nchw, params):
    def conv(x, w_hwio, b):
        w_oihw = jnp.transpose(w_hwio, (3, 2, 0, 1))
        y = jax.lax.conv_general_dilated(
            x, w_oihw, window_strides=(1, 1), padding=((1, 1), (1, 1)),
            dimension_numbers=("NCHW", "OIHW", "NCHW"))
        return y + b.reshape(1, -1, 1, 1)

    def bn_relu_(x, g, be):
        mean = jnp.mean(x, axis=(0, 2, 3), keepdims=True)
        var = jnp.var(x, axis=(0, 2, 3), keepdims=True)
        xn = (x - mean) / jnp.sqrt(var + BN_EPS)
        return jax.nn.relu(xn * g.reshape(1, -1, 1, 1) + be.reshape(1, -1, 1, 1))

    y = bn_relu_(conv(x_nchw, params["w1"], params["b1"]),
                 params["gamma1"], params["beta1"])
    y = bn_relu_(conv(y, params["w2"], params["b2"]),
                 params["gamma2"], params["beta2"])
    N, C, H, W = y.shape
    pool = y.reshape(N, C, H // 2, 2, W // 2, 2).max(axis=(3, 5))
    return y, pool


if __name__ == "__main__":
    N, C, H, W, F = 2, 4, 16, 16, 8
    key = jax.random.PRNGKey(0)
    kx, kp = jax.random.split(key)
    x = jax.random.normal(kx, (N, C, H, W), jnp.float32)
    params = init_params(kp, C, F)

    fwd = jax.jit(encoder_forward)
    x_conv, x_pool = fwd(x, params)
    jax.block_until_ready((x_conv, x_pool))

    assert x_conv.shape == (N, F, H, W)
    assert x_pool.shape == (N, F, H // 2, W // 2)

    ref_conv, ref_pool = reference_forward(x, params)
    ok = (bool(jnp.allclose(x_conv, ref_conv, atol=5e-2, rtol=5e-2))
          and bool(jnp.allclose(x_pool, ref_pool, atol=5e-2, rtol=5e-2)))
    if not ok:
        raise AssertionError("Pallas Encoder output mismatch vs JAX reference")
    print("KERNEL_OK")
</pallas_src>

<mosaic_0001>
module attributes {stable_mosaic.version = 11 : i64} {
  func.func @_conv_bn_stats_kernel(%arg0: i32, %arg1: memref<1x4x256xf32, #tpu.memory_space<vmem>>, %arg2: memref<4x1xf32, #tpu.memory_space<vmem>>, %arg3: memref<4x1xf32, #tpu.memory_space<vmem>>, %arg4: memref<8x36xbf16, #tpu.memory_space<vmem>>, %arg5: memref<8x1xf32, #tpu.memory_space<vmem>>, %arg6: memref<1x8x256xbf16, #tpu.memory_space<vmem>>, %arg7: memref<1x8x1xf32, #tpu.memory_space<vmem>>, %arg8: memref<1x8x1xf32, #tpu.memory_space<vmem>>) attributes {dimension_semantics = [#tpu.dimension_semantics<parallel>], iteration_bounds = array<i64: 2>, scalar_prefetch = 0 : i64, scratch_operands = 0 : i64, tpu.core_type = #tpu.core_type<tc>, window_params = [{transform_indices = @transform_0, window_bounds = array<i64: 1, 4, 256>}, {pipeline_mode = #tpu.pipeline_mode<synchronous>, transform_indices = @transform_1, window_bounds = array<i64: 4, 1>}, {pipeline_mode = #tpu.pipeline_mode<synchronous>, transform_indices = @transform_2, window_bounds = array<i64: 4, 1>}, {pipeline_mode = #tpu.pipeline_mode<synchronous>, transform_indices = @transform_3, window_bounds = array<i64: 8, 36>}, {pipeline_mode = #tpu.pipeline_mode<synchronous>, transform_indices = @transform_4, window_bounds = array<i64: 8, 1>}, {transform_indices = @transform_5, window_bounds = array<i64: 1, 8, 256>}, {transform_indices = @transform_6, window_bounds = array<i64: 1, 8, 1>}, {transform_indices = @transform_7, window_bounds = array<i64: 1, 8, 1>}]} {
    %c0 = arith.constant 0 : index
    %c0_0 = arith.constant 0 : index
    %c0_1 = arith.constant 0 : index
    %0 = vector.load %arg1[%c0, %c0_0, %c0_1] : memref<1x4x256xf32, #tpu.memory_space<vmem>>, vector<1x4x256xf32>
    %1 = vector.shape_cast %0 : vector<1x4x256xf32> to vector<4x256xf32>
    %2 = tpu.iota {dimensions = array<i32: 1>} : vector<1x256xi32>
    %c15_i32 = arith.constant 15 : i32
    %3 = vector.broadcast %c15_i32 : i32 to vector<1x256xi32>
    %4 = arith.andi %2, %3 : vector<1x256xi32>
    %c17_i32 = arith.constant 17 : i32
    %5 = tpu.dynamic_rotate %1 by %c17_i32 dim 1 : vector<4x256xf32>, i32 -> vector<4x256xf32>
    %c16_i32 = arith.constant 16 : i32
    %6 = vector.broadcast %c16_i32 : i32 to vector<1x256xi32>
    %7 = arith.cmpi sge, %2, %6 : vector<1x256xi32>
    %c1_i32 = arith.constant 1 : i32
    %8 = vector.broadcast %c1_i32 : i32 to vector<1x256xi32>
    %9 = arith.cmpi sge, %4, %8 : vector<1x256xi32>
    %10 = arith.andi %7, %9 : vector<1x256xi1>
    %11 = arith.extui %10 : vector<1x256xi1> to vector<1x256xi32>
    %12 = arith.sitofp %11 : vector<1x256xi32> to vector<1x256xf32>
    %13 = vector.broadcast %12 : vector<1x256xf32> to vector<4x256xf32>
    %14 = arith.mulf %5, %13 : vector<4x256xf32>
    %c16_i32_2 = arith.constant 16 : i32
    %15 = tpu.dynamic_rotate %1 by %c16_i32_2 dim 1 : vector<4x256xf32>, i32 -> vector<4x256xf32>
    %c16_i32_3 = arith.constant 16 : i32
    %16 = vector.broadcast %c16_i32_3 : i32 to vector<1x256xi32>
    %17 = arith.cmpi sge, %2, %16 : vector<1x256xi32>
    %18 = arith.extui %17 : vector<1x256xi1> to vector<1x256xi32>
    %19 = arith.sitofp %18 : vector<1x256xi32> to vector<1x256xf32>
    %20 = vector.broadcast %19 : vector<1x256xf32> to vector<4x256xf32>
    %21 = arith.mulf %15, %20 : vector<4x256xf32>
    %c15_i32_4 = arith.constant 15 : i32
    %22 = tpu.dynamic_rotate %1 by %c15_i32_4 dim 1 : vector<4x256xf32>, i32 -> vector<4x256xf32>
    %c16_i32_5 = arith.constant 16 : i32
    %23 = vector.broadcast %c16_i32_5 : i32 to vector<1x256xi32>
    %24 = arith.cmpi sge, %2, %23 : vector<1x256xi32>
    %c15_i32_6 = arith.constant 15 : i32
    %25 = vector.broadcast %c15_i32_6 : i32 to vector<1x256xi32>
    %26 = arith.cmpi slt, %4, %25 : vector<1x256xi32>
    %27 = arith.andi %24, %26 : vector<1x256xi1>
    %28 = arith.extui %27 : vector<1x256xi1> to vector<1x256xi32>
    %29 = arith.sitofp %28 : vector<1x256xi32> to vector<1x256xf32>
    %30 = vector.broadcast %29 : vector<1x256xf32> to vector<4x256xf32>
    %31 = arith.mulf %22, %30 : vector<4x256xf32>
    %c1_i32_7 = arith.constant 1 : i32
    %32 = tpu.dynamic_rotate %1 by %c1_i32_7 dim 1 : vector<4x256xf32>, i32 -> vector<4x256xf32>
    %c1_i32_8 = arith.constant 1 : i32
    %33 = vector.broadcast %c1_i32_8 : i32 to vector<1x256xi32>
    %34 = arith.cmpi sge, %4, %33 : vector<1x256xi32>
    %35 = arith.extui %34 : vector<1x256xi1> to vector<1x256xi32>
    %36 = arith.sitofp %35 : vector<1x256xi32> to vector<1x256xf32>
    %37 = vector.broadcast %36 : vector<1x256xf32> to vector<4x256xf32>
    %38 = arith.mulf %32, %37 : vector<4x256xf32>
    %c255_i32 = arith.constant 255 : i32
    %39 = tpu.dynamic_rotate %1 by %c255_i32 dim 1 : vector<4x256xf32>, i32 -> vector<4x256xf32>
    %c15_i32_9 = arith.constant 15 : i32
    %40 = vector.broadcast %c15_i32_9 : i32 to vector<1x256xi32>
    %41 = arith.cmpi slt, %4, %40 : vector<1x256xi32>
    %42 = arith.extui %41 : vector<1x256xi1> to vector<1x256xi32>
    %43 = arith.sitofp %42 : vector<1x256xi32> to vector<1x256xf32>
    %44 = vector.broadcast %43 : vector<1x256xf32> to vector<4x256xf32>
    %45 = arith.mulf %39, %44 : vector<4x256xf32>
    %c241_i32 = arith.constant 241 : i32
    %46 = tpu.dynamic_rotate %1 by %c241_i32 dim 1 : vector<4x256xf32>, i32 -> vector<4x256xf32>
    %c240_i32 = arith.constant 240 : i32
    %47 = vector.broadcast %c240_i32 : i32 to vector<1x256xi32>
    %48 = arith.cmpi slt, %2, %47 : vector<1x256xi32>
    %c1_i32_10 = arith.constant 1 : i32
    %49 = vector.broadcast %c1_i32_10 : i32 to vector<1x256xi32>
    %50 = arith.cmpi sge, %4, %49 : vector<1x256xi32>
    %51 = arith.andi %48, %50 : vector<1x256xi1>
    %52 = arith.extui %51 : vector<1x256xi1> to vector<1x256xi32>
    %53 = arith.sitofp %52 : vector<1x256xi32> to vector<1x256xf32>
    %54 = vector.broadcast %53 : vector<1x256xf32> to vector<4x256xf32>
    %55 = arith.mulf %46, %54 : vector<4x256xf32>
    %c240_i32_11 = arith.constant 240 : i32
    %56 = tpu.dynamic_rotate %1 by %c240_i32_11 dim 1 : vector<4x256xf32>, i32 -> vector<4x256xf32>
    %c240_i32_12 = arith.constant 240 : i32
    %57 = vector.broadcast %c240_i32_12 : i32 to vector<1x256xi32>
    %58 = arith.cmpi slt, %2, %57 : vector<1x256xi32>
    %59 = arith.extui %58 : vector<1x256xi1> to vector<1x256xi32>
    %60 = arith.sitofp %59 : vector<1x256xi32> to vector<1x256xf32>
    %61 = vector.broadcast %60 : vector<1x256xf32> to vector<4x256xf32>
    %62 = arith.mulf %56, %61 : vector<4x256xf32>
    %c239_i32 = arith.constant 239 : i32
    %63 = tpu.dynamic_rotate %1 by %c239_i32 dim 1 : vector<4x256xf32>, i32 -> vector<4x256xf32>
    %c240_i32_13 = arith.constant 240 : i32
    %64 = vector.broadcast %c240_i32_13 : i32 to vector<1x256xi32>
    %65 = arith.cmpi slt, %2, %64 : vector<1x256xi32>
    %c15_i32_14 = arith.constant 15 : i32
    %66 = vector.broadcast %c15_i32_14 : i32 to vector<1x256xi32>
    %67 = arith.cmpi slt, %4, %66 : vector<1x256xi32>
    %68 = arith.andi %65, %67 : vector<1x256xi1>
    %69 = arith.extui %68 : vector<1x256xi1> to vector<1x256xi32>
    %70 = arith.sitofp %69 : vector<1x256xi32> to vector<1x256xf32>
    %71 = vector.broadcast %70 : vector<1x256xf32> to vector<4x256xf32>
    %72 = arith.mulf %63, %71 : vector<4x256xf32>
    %73 = tpu.concatenate %14, %21, %31, %38, %1, %45, %55, %62, %72 in 0 : vector<4x256xf32>, vector<4x256xf32>, vector<4x256xf32>, vector<4x256xf32>, vector<4x256xf32>, vector<4x256xf32>, vector<4x256xf32>, vector<4x256xf32>, vector<4x256xf32> -> vector<36x256xf32>
    %74 = arith.truncf %73 : vector<36x256xf32> to vector<36x256xbf16>
    %c0_15 = arith.constant 0 : index
    %c0_16 = arith.constant 0 : index
    %75 = vector.load %arg4[%c0_15, %c0_16] : memref<8x36xbf16, #tpu.memory_space<vmem>>, vector<8x36xbf16>
    %cst = arith.constant dense<0.000000e+00> : vector<8x256xf32>
    %76 = tpu.matmul %75, %74, %cst {dimension_numbers = #tpu.dot_dimension_numbers<[1], [0], [0], [1], [0, 0, 1, 1], [], []>} : vector<8x36xbf16>, vector<36x256xbf16>, vector<8x256xf32> -> vector<8x256xf32>
    %c0_17 = arith.constant 0 : index
    %c0_18 = arith.constant 0 : index
    %77 = vector.load %arg5[%c0_17, %c0_18] : memref<8x1xf32, #tpu.memory_space<vmem>>, vector<8x1xf32>
    %78 = vector.broadcast %77 : vector<8x1xf32> to vector<8x256xf32>
    %79 = arith.addf %76, %78 : vector<8x256xf32>
    %80 = arith.truncf %79 : vector<8x256xf32> to vector<8x256xbf16>
    %c0_19 = arith.constant 0 : index
    %c0_20 = arith.constant 0 : index
    %c0_21 = arith.constant 0 : index
    %81 = vector.load %arg6[%c0_19, %c0_20, %c0_21] : memref<1x8x256xbf16, #tpu.memory_space<vmem>>, vector<1x8x256xbf16>
    %82 = vector.shape_cast %81 : vector<1x8x256xbf16> to vector<8x256xbf16>
    %83 = vector.shape_cast %80 : vector<8x256xbf16> to vector<1x8x256xbf16>
    tpu.vector_store %arg6[%c0_19, %c0_20, %c0_21], %83 {strides = array<i32>} : memref<1x8x256xbf16, #tpu.memory_space<vmem>>, vector<1x8x256xbf16>,
    %cst_22 = arith.constant dense<0.000000e+00> : vector<8xf32>
    %84 = vector.multi_reduction <add>, %79, %cst_22 [1] : vector<8x256xf32> to vector<8xf32>
    %85 = vector.shape_cast %84 : vector<8xf32> to vector<8x1xf32>
    %c0_23 = arith.constant 0 : index
    %c0_24 = arith.constant 0 : index
    %c0_25 = arith.constant 0 : index
    %86 = vector.load %arg7[%c0_23, %c0_24, %c0_25] : memref<1x8x1xf32, #tpu.memory_space<vmem>>, vector<1x8x1xf32>
    %87 = vector.shape_cast %86 : vector<1x8x1xf32> to vector<8x1xf32>
    %88 = vector.shape_cast %85 : vector<8x1xf32> to vector<1x8x1xf32>
    tpu.vector_store %arg7[%c0_23, %c0_24, %c0_25], %88 {strides = array<i32>} : memref<1x8x1xf32, #tpu.memory_space<vmem>>, vector<1x8x1xf32>,
    %89 = arith.mulf %79, %79 : vector<8x256xf32>
    %cst_26 = arith.constant dense<0.000000e+00> : vector<8xf32>
    %90 = vector.multi_reduction <add>, %89, %cst_26 [1] : vector<8x256xf32> to vector<8xf32>
    %91 = vector.shape_cast %90 : vector<8xf32> to vector<8x1xf32>
    %c0_27 = arith.constant 0 : index
    %c0_28 = arith.constant 0 : index
    %c0_29 = arith.constant 0 : index
    %92 = vector.load %arg8[%c0_27, %c0_28, %c0_29] : memref<1x8x1xf32, #tpu.memory_space<vmem>>, vector<1x8x1xf32>
    %93 = vector.shape_cast %92 : vector<1x8x1xf32> to vector<8x1xf32>
    %94 = vector.shape_cast %91 : vector<8x1xf32> to vector<1x8x1xf32>
    tpu.vector_store %arg8[%c0_27, %c0_28, %c0_29], %94 {strides = array<i32>} : memref<1x8x1xf32, #tpu.memory_space<vmem>>, vector<1x8x1xf32>,
    return
  }
  func.func @transform_0(%arg0: i32) -> (i32, i32, i32) {
    %c0_i32 = arith.constant 0 : i32
    %c0_i32_0 = arith.constant 0 : i32
    %c0_i32_1 = arith.constant 0 : i32
    return %arg0, %c0_i32, %c0_i32_0 : i32, i32, i32
  }
  func.func @transform_1(%arg0: i32) -> (i32, i32) {
    %c0_i32 = arith.constant 0 : i32
    %c0_i32_0 = arith.constant 0 : i32
    %c0_i32_1 = arith.constant 0 : i32
    return %c0_i32, %c0_i32_0 : i32, i32
  }
  func.func @transform_2(%arg0: i32) -> (i32, i32) {
    %c0_i32 = arith.constant 0 : i32
    %c0_i32_0 = arith.constant 0 : i32
    %c0_i32_1 = arith.constant 0 : i32
    return %c0_i32, %c0_i32_0 : i32, i32
  }
  func.func @transform_3(%arg0: i32) -> (i32, i32) {
    %c0_i32 = arith.constant 0 : i32
    %c0_i32_0 = arith.constant 0 : i32
    %c0_i32_1 = arith.constant 0 : i32
    return %c0_i32, %c0_i32_0 : i32, i32
  }
  func.func @transform_4(%arg0: i32) -> (i32, i32) {
    %c0_i32 = arith.constant 0 : i32
    %c0_i32_0 = arith.constant 0 : i32
    %c0_i32_1 = arith.constant 0 : i32
    return %c0_i32, %c0_i32_0 : i32, i32
  }
  func.func @transform_5(%arg0: i32) -> (i32, i32, i32) {
    %c0_i32 = arith.constant 0 : i32
    %c0_i32_0 = arith.constant 0 : i32
    %c0_i32_1 = arith.constant 0 : i32
    return %arg0, %c0_i32, %c0_i32_0 : i32, i32, i32
  }
  func.func @transform_6(%arg0: i32) -> (i32, i32, i32) {
    %c0_i32 = arith.constant 0 : i32
    %c0_i32_0 = arith.constant 0 : i32
    %c0_i32_1 = arith.constant 0 : i32
    return %arg0, %c0_i32, %c0_i32_0 : i32, i32, i32
  }
  func.func @transform_7(%arg0: i32) -> (i32, i32, i32) {
    %c0_i32 = arith.constant 0 : i32
    %c0_i32_0 = arith.constant 0 : i32
    %c0_i32_1 = arith.constant 0 : i32
    return %arg0, %c0_i32, %c0_i32_0 : i32, i32, i32
  }
}

module attributes {stable_mosaic.version = 11 : i64} {
  func.func @_conv_bn_stats_kernel(%arg0: i32, %arg1: memref<1x8x256xbf16, #tpu.memory_space<vmem>>, %arg2: memref<8x1xf32, #tpu.memory_space<vmem>>, %arg3: memref<8x1xf32, #tpu.memory_space<vmem>>, %arg4: memref<8x72xbf16, #tpu.memory_space<vmem>>, %arg5: memref<8x1xf32, #tpu.memory_space<vmem>>, %arg6: memref<1x8x256xbf16, #tpu.memory_space<vmem>>, %arg7: memref<1x8x1xf32, #tpu.memory_space<vmem>>, %arg8: memref<1x8x1xf32, #tpu.memory_space<vmem>>) attributes {dimension_semantics = [#tpu.dimension_semantics<parallel>], iteration_bounds = array<i64: 2>, scalar_prefetch = 0 : i64, scratch_operands = 0 : i64, tpu.core_type = #tpu.core_type<tc>, window_params = [{transform_indices = @transform_0, window_bounds = array<i64: 1, 8, 256>}, {pipeline_mode = #tpu.pipeline_mode<synchronous>, transform_indices = @transform_1, window_bounds = array<i64: 8, 1>}, {pipeline_mode = #tpu.pipeline_mode<synchronous>, transform_indices = @transform_2, window_bounds = array<i64: 8, 1>}, {pipeline_mode = #tpu.pipeline_mode<synchronous>, transform_indices = @transform_3, window_bounds = array<i64: 8, 72>}, {pipeline_mode = #tpu.pipeline_mode<synchronous>, transform_indices = @transform_4, window_bounds = array<i64: 8, 1>}, {transform_indices = @transform_5, window_bounds = array<i64: 1, 8, 256>}, {transform_indices = @transform_6, window_bounds = array<i64: 1, 8, 1>}, {transform_indices = @transform_7, window_bounds = array<i64: 1, 8, 1>}]} {
    %c0 = arith.constant 0 : index
    %c0_0 = arith.constant 0 : index
    %c0_1 = arith.constant 0 : index
    %0 = vector.load %arg1[%c0, %c0_0, %c0_1] : memref<1x8x256xbf16, #tpu.memory_space<vmem>>, vector<1x8x256xbf16>
    %1 = vector.shape_cast %0 : vector<1x8x256xbf16> to vector<8x256xbf16>
    %2 = arith.extf %1 : vector<8x256xbf16> to vector<8x256xf32>
    %c0_2 = arith.constant 0 : index
    %c0_3 = arith.constant 0 : index
    %3 = vector.load %arg2[%c0_2, %c0_3] : memref<8x1xf32, #tpu.memory_space<vmem>>, vector<8x1xf32>
    %4 = vector.broadcast %3 : vector<8x1xf32> to vector<8x256xf32>
    %5 = arith.mulf %2, %4 : vector<8x256xf32>
    %c0_4 = arith.constant 0 : index
    %c0_5 = arith.constant 0 : index
    %6 = vector.load %arg3[%c0_4, %c0_5] : memref<8x1xf32, #tpu.memory_space<vmem>>, vector<8x1xf32>
    %7 = vector.broadcast %6 : vector<8x1xf32> to vector<8x256xf32>
    %8 = arith.addf %5, %7 : vector<8x256xf32>
    %cst = arith.constant 0.000000e+00 : f32
    %9 = vector.broadcast %cst : f32 to vector<8x256xf32>
    %10 = arith.maximumf %8, %9 : vector<8x256xf32>
    %11 = tpu.iota {dimensions = array<i32: 1>} : vector<1x256xi32>
    %c15_i32 = arith.constant 15 : i32
    %12 = vector.broadcast %c15_i32 : i32 to vector<1x256xi32>
    %13 = arith.andi %11, %12 : vector<1x256xi32>
    %c17_i32 = arith.constant 17 : i32
    %14 = tpu.dynamic_rotate %10 by %c17_i32 dim 1 : vector<8x256xf32>, i32 -> vector<8x256xf32>
    %c16_i32 = arith.constant 16 : i32
    %15 = vector.broadcast %c16_i32 : i32 to vector<1x256xi32>
    %16 = arith.cmpi sge, %11, %15 : vector<1x256xi32>
    %c1_i32 = arith.constant 1 : i32
    %17 = vector.broadcast %c1_i32 : i32 to vector<1x256xi32>
    %18 = arith.cmpi sge, %13, %17 : vector<1x256xi32>
    %19 = arith.andi %16, %18 : vector<1x256xi1>
    %20 = arith.extui %19 : vector<1x256xi1> to vector<1x256xi32>
    %21 = arith.sitofp %20 : vector<1x256xi32> to vector<1x256xf32>
    %22 = vector.broadcast %21 : vector<1x256xf32> to vector<8x256xf32>
    %23 = arith.mulf %14, %22 : vector<8x256xf32>
    %c16_i32_6 = arith.constant 16 : i32
    %24 = tpu.dynamic_rotate %10 by %c16_i32_6 dim 1 : vector<8x256xf32>, i32 -> vector<8x256xf32>
    %c16_i32_7 = arith.constant 16 : i32
    %25 = vector.broadcast %c16_i32_7 : i32 to vector<1x256xi32>
    %26 = arith.cmpi sge, %11, %25 : vector<1x256xi32>
    %27 = arith.extui %26 : vector<1x256xi1> to vector<1x256xi32>
    %28 = arith.sitofp %27 : vector<1x256xi32> to vector<1x256xf32>
    %29 = vector.broadcast %28 : vector<1x256xf32> to vector<8x256xf32>
    %30 = arith.mulf %24, %29 : vector<8x256xf32>
    %c15_i32_8 = arith.constant 15 : i32
    %31 = tpu.dynamic_rotate %10 by %c15_i32_8 dim 1 : vector<8x256xf32>, i32 -> vector<8x256xf32>
    %c16_i32_9 = arith.constant 16 : i32
    %32 = vector.broadcast %c16_i32_9 : i32 to vector<1x256xi32>
    %33 = arith.cmpi sge, %11, %32 : vector<1x256xi32>
    %c15_i32_10 = arith.constant 15 : i32
    %34 = vector.broadcast %c15_i32_10 : i32 to vector<1x256xi32>
    %35 = arith.cmpi slt, %13, %34 : vector<1x256xi32>
    %36 = arith.andi %33, %35 : vector<1x256xi1>
    %37 = arith.extui %36 : vector<1x256xi1> to vector<1x256xi32>
    %38 = arith.sitofp %37 : vector<1x256xi32> to vector<1x256xf32>
    %39 = vector.broadcast %38 : vector<1x256xf32> to vector<8x256xf32>
    %40 = arith.mulf %31, %39 : vector<8x256xf32>
    %c1_i32_11 = arith.constant 1 : i32
    %41 = tpu.dynamic_rotate %10 by %c1_i32_11 dim 1 : vector<8x256xf32>, i32 -> vector<8x256xf32>
    %c1_i32_12 = arith.constant 1 : i32
    %42 = vector.broadcast %c1_i32_12 : i32 to vector<1x256xi32>
    %43 = arith.cmpi sge, %13, %42 : vector<1x256xi32>
    %44 = arith.extui %43 : vector<1x256xi1> to vector<1x256xi32>
    %45 = arith.sitofp %44 : vector<1x256xi32> to vector<1x256xf32>
    %46 = vector.broadcast %45 : vector<1x256xf32> to vector<8x256xf32>
    %47 = arith.mulf %41, %46 : vector<8x256xf32>
    %c255_i32 = arith.constant 255 : i32
    %48 = tpu.dynamic_rotate %10 by %c255_i32 dim 1 : vector<8x256xf32>, i32 -> vector<8x256xf32>
    %c15_i32_13 = arith.constant 15 : i32
    %49 = vector.broadcast %c15_i32_13 : i32 to vector<1x256xi32>
    %50 = arith.cmpi slt, %13, %49 : vector<1x256xi32>
    %51 = arith.extui %50 : vector<1x256xi1> to vector<1x256xi32>
    %52 = arith.sitofp %51 : vector<1x256xi32> to vector<1x256xf32>
    %53 = vector.broadcast %52 : vector<1x256xf32> to vector<8x256xf32>
    %54 = arith.mulf %48, %53 : vector<8x256xf32>
    %c241_i32 = arith.constant 241 : i32
    %55 = tpu.dynamic_rotate %10 by %c241_i32 dim 1 : vector<8x256xf32>, i32 -> vector<8x256xf32>
    %c240_i32 = arith.constant 240 : i32
    %56 = vector.broadcast %c240_i32 : i32 to vector<1x256xi32>
    %57 = arith.cmpi slt, %11, %56 : vector<1x256xi32>
    %c1_i32_14 = arith.constant 1 : i32
    %58 = vector.broadcast %c1_i32_14 : i32 to vector<1x256xi32>
    %59 = arith.cmpi sge, %13, %58 : vector<1x256xi32>
    %60 = arith.andi %57, %59 : vector<1x256xi1>
    %61 = arith.extui %60 : vector<1x256xi1> to vector<1x256xi32>
    %62 = arith.sitofp %61 : vector<1x256xi32> to vector<1x256xf32>
    %63 = vector.broadcast %62 : vector<1x256xf32> to vector<8x256xf32>
    %64 = arith.mulf %55, %63 : vector<8x256xf32>
    %c240_i32_15 = arith.constant 240 : i32
    %65 = tpu.dynamic_rotate %10 by %c240_i32_15 dim 1 : vector<8x256xf32>, i32 -> vector<8x256xf32>
    %c240_i32_16 = arith.constant 240 : i32
    %66 = vector.broadcast %c240_i32_16 : i32 to vector<1x256xi32>
    %67 = arith.cmpi slt, %11, %66 : vector<1x256xi32>
    %68 = arith.extui %67 : vector<1x256xi1> to vector<1x256xi32>
    %69 = arith.sitofp %68 : vector<1x256xi32> to vector<1x256xf32>
    %70 = vector.broadcast %69 : vector<1x256xf32> to vector<8x256xf32>
    %71 = arith.mulf %65, %70 : vector<8x256xf32>
    %c239_i32 = arith.constant 239 : i32
    %72 = tpu.dynamic_rotate %10 by %c239_i32 dim 1 : vector<8x256xf32>, i32 -> vector<8x256xf32>
    %c240_i32_17 = arith.constant 240 : i32
    %73 = vector.broadcast %c240_i32_17 : i32 to vector<1x256xi32>
    %74 = arith.cmpi slt, %11, %73 : vector<1x256xi32>
    %c15_i32_18 = arith.constant 15 : i32
    %75 = vector.broadcast %c15_i32_18 : i32 to vector<1x256xi32>
    %76 = arith.cmpi slt, %13, %75 : vector<1x256xi32>
    %77 = arith.andi %74, %76 : vector<1x256xi1>
    %78 = arith.extui %77 : vector<1x256xi1> to vector<1x256xi32>
    %79 = arith.sitofp %78 : vector<1x256xi32> to vector<1x256xf32>
    %80 = vector.broadcast %79 : vector<1x256xf32> to vector<8x256xf32>
    %81 = arith.mulf %72, %80 : vector<8x256xf32>
    %82 = tpu.concatenate %23, %30, %40, %47, %10, %54, %64, %71, %81 in 0 : vector<8x256xf32>, vector<8x256xf32>, vector<8x256xf32>, vector<8x256xf32>, vector<8x256xf32>, vector<8x256xf32>, vector<8x256xf32>, vector<8x256xf32>, vector<8x256xf32> -> vector<72x256xf32>
    %83 = arith.truncf %82 : vector<72x256xf32> to vector<72x256xbf16>
    %c0_19 = arith.constant 0 : index
    %c0_20 = arith.constant 0 : index
    %84 = vector.load %arg4[%c0_19, %c0_20] : memref<8x72xbf16, #tpu.memory_space<vmem>>, vector<8x72xbf16>
    %cst_21 = arith.constant dense<0.000000e+00> : vector<8x256xf32>
    %85 = tpu.matmul %84, %83, %cst_21 {dimension_numbers = #tpu.dot_dimension_numbers<[1], [0], [0], [1], [0, 0, 1, 1], [], []>} : vector<8x72xbf16>, vector<72x256xbf16>, vector<8x256xf32> -> vector<8x256xf32>
    %c0_22 = arith.constant 0 : index
    %c0_23 = arith.constant 0 : index
    %86 = vector.load %arg5[%c0_22, %c0_23] : memref<8x1xf32, #tpu.memory_space<vmem>>, vector<8x1xf32>
    %87 = vector.broadcast %86 : vector<8x1xf32> to vector<8x256xf32>
    %88 = arith.addf %85, %87 : vector<8x256xf32>
    %89 = arith.truncf %88 : vector<8x256xf32> to vector<8x256xbf16>
    %c0_24 = arith.constant 0 : index
    %c0_25 = arith.constant 0 : index
    %c0_26 = arith.constant 0 : index
    %90 = vector.load %arg6[%c0_24, %c0_25, %c0_26] : memref<1x8x256xbf16, #tpu.memory_space<vmem>>, vector<1x8x256xbf16>
    %91 = vector.shape_cast %90 : vector<1x8x256xbf16> to vector<8x256xbf16>
    %92 = vector.shape_cast %89 : vector<8x256xbf16> to vector<1x8x256xbf16>
    tpu.vector_store %arg6[%c0_24, %c0_25, %c0_26], %92 {strides = array<i32>} : memref<1x8x256xbf16, #tpu.memory_space<vmem>>, vector<1x8x256xbf16>,
    %cst_27 = arith.constant dense<0.000000e+00> : vector<8xf32>
    %93 = vector.multi_reduction <add>, %88, %cst_27 [1] : vector<8x256xf32> to vector<8xf32>
    %94 = vector.shape_cast %93 : vector<8xf32> to vector<8x1xf32>
    %c0_28 = arith.constant 0 : index
    %c0_29 = arith.constant 0 : index
    %c0_30 = arith.constant 0 : index
    %95 = vector.load %arg7[%c0_28, %c0_29, %c0_30] : memref<1x8x1xf32, #tpu.memory_space<vmem>>, vector<1x8x1xf32>
    %96 = vector.shape_cast %95 : vector<1x8x1xf32> to vector<8x1xf32>
    %97 = vector.shape_cast %94 : vector<8x1xf32> to vector<1x8x1xf32>
    tpu.vector_store %arg7[%c0_28, %c0_29, %c0_30], %97 {strides = array<i32>} : memref<1x8x1xf32, #tpu.memory_space<vmem>>, vector<1x8x1xf32>,
    %98 = arith.mulf %88, %88 : vector<8x256xf32>
    %cst_31 = arith.constant dense<0.000000e+00> : vector<8xf32>
    %99 = vector.multi_reduction <add>, %98, %cst_31 [1] : vector<8x256xf32> to vector<8xf32>
    %100 = vector.shape_cast %99 : vector<8xf32> to vector<8x1xf32>
    %c0_32 = arith.constant 0 : index
    %c0_33 = arith.constant 0 : index
    %c0_34 = arith.constant 0 : index
    %101 = vector.load %arg8[%c0_32, %c0_33, %c0_34] : memref<1x8x1xf32, #tpu.memory_space<vmem>>, vector<1x8x1xf32>
    %102 = vector.shape_cast %101 : vector<1x8x1xf32> to vector<8x1xf32>
    %103 = vector.shape_cast %100 : vector<8x1xf32> to vector<1x8x1xf32>
    tpu.vector_store %arg8[%c0_32, %c0_33, %c0_34], %103 {strides = array<i32>} : memref<1x8x1xf32, #tpu.memory_space<vmem>>, vector<1x8x1xf32>,
    return
  }
  func.func @transform_0(%arg0: i32) -> (i32, i32, i32) {
    %c0_i32 = arith.constant 0 : i32
    %c0_i32_0 = arith.constant 0 : i32
    %c0_i32_1 = arith.constant 0 : i32
    return %arg0, %c0_i32, %c0_i32_0 : i32, i32, i32
  }
  func.func @transform_1(%arg0: i32) -> (i32, i32) {
    %c0_i32 = arith.constant 0 : i32
    %c0_i32_0 = arith.constant 0 : i32
    %c0_i32_1 = arith.constant 0 : i32
    return %c0_i32, %c0_i32_0 : i32, i32
  }
  func.func @transform_2(%arg0: i32) -> (i32, i32) {
    %c0_i32 = arith.constant 0 : i32
    %c0_i32_0 = arith.constant 0 : i32
    %c0_i32_1 = arith.constant 0 : i32
    return %c0_i32, %c0_i32_0 : i32, i32
  }
  func.func @transform_3(%arg0: i32) -> (i32, i32) {
    %c0_i32 = arith.constant 0 : i32
    %c0_i32_0 = arith.constant 0 : i32
    %c0_i32_1 = arith.constant 0 : i32
    return %c0_i32, %c0_i32_0 : i32, i32
  }
  func.func @transform_4(%arg0: i32) -> (i32, i32) {
    %c0_i32 = arith.constant 0 : i32
    %c0_i32_0 = arith.constant 0 : i32
    %c0_i32_1 = arith.constant 0 : i32
    return %c0_i32, %c0_i32_0 : i32, i32
  }
  func.func @transform_5(%arg0: i32) -> (i32, i32, i32) {
    %c0_i32 = arith.constant 0 : i32
    %c0_i32_0 = arith.constant 0 : i32
    %c0_i32_1 = arith.constant 0 : i32
    return %arg0, %c0_i32, %c0_i32_0 : i32, i32, i32
  }
  func.func @transform_6(%arg0: i32) -> (i32, i32, i32) {
    %c0_i32 = arith.constant 0 : i32
    %c0_i32_0 = arith.constant 0 : i32
    %c0_i32_1 = arith.constant 0 : i32
    return %arg0, %c0_i32, %c0_i32_0 : i32, i32, i32
  }
  func.func @transform_7(%arg0: i32) -> (i32, i32, i32) {
    %c0_i32 = arith.constant 0 : i32
    %c0_i32_0 = arith.constant 0 : i32
    %c0_i32_1 = arith.constant 0 : i32
    return %arg0, %c0_i32, %c0_i32_0 : i32, i32, i32
  }
}

module attributes {stable_mosaic.version = 11 : i64} {
  func.func @_bn_relu_pool_kernel(%arg0: i32, %arg1: memref<1x8x256xbf16, #tpu.memory_space<vmem>>, %arg2: memref<8x1xf32, #tpu.memory_space<vmem>>, %arg3: memref<8x1xf32, #tpu.memory_space<vmem>>, %arg4: memref<256x64xf32, #tpu.memory_space<vmem>>, %arg5: memref<1x8x256xf32, #tpu.memory_space<vmem>>, %arg6: memref<1x8x64xf32, #tpu.memory_space<vmem>>) attributes {dimension_semantics = [#tpu.dimension_semantics<parallel>], iteration_bounds = array<i64: 2>, scalar_prefetch = 0 : i64, scratch_operands = 0 : i64, tpu.core_type = #tpu.core_type<tc>, window_params = [{transform_indices = @transform_0, window_bounds = array<i64: 1, 8, 256>}, {pipeline_mode = #tpu.pipeline_mode<synchronous>, transform_indices = @transform_1, window_bounds = array<i64: 8, 1>}, {pipeline_mode = #tpu.pipeline_mode<synchronous>, transform_indices = @transform_2, window_bounds = array<i64: 8, 1>}, {pipeline_mode = #tpu.pipeline_mode<synchronous>, transform_indices = @transform_3, window_bounds = array<i64: 256, 64>}, {transform_indices = @transform_4, window_bounds = array<i64: 1, 8, 256>}, {transform_indices = @transform_5, window_bounds = array<i64: 1, 8, 64>}]} {
    %c0 = arith.constant 0 : index
    %c0_0 = arith.constant 0 : index
    %c0_1 = arith.constant 0 : index
    %0 = vector.load %arg1[%c0, %c0_0, %c0_1] : memref<1x8x256xbf16, #tpu.memory_space<vmem>>, vector<1x8x256xbf16>
    %1 = vector.shape_cast %0 : vector<1x8x256xbf16> to vector<8x256xbf16>
    %2 = arith.extf %1 : vector<8x256xbf16> to vector<8x256xf32>
    %c0_2 = arith.constant 0 : index
    %c0_3 = arith.constant 0 : index
    %3 = vector.load %arg2[%c0_2, %c0_3] : memref<8x1xf32, #tpu.memory_space<vmem>>, vector<8x1xf32>
    %4 = vector.broadcast %3 : vector<8x1xf32> to vector<8x256xf32>
    %5 = arith.mulf %2, %4 : vector<8x256xf32>
    %c0_4 = arith.constant 0 : index
    %c0_5 = arith.constant 0 : index
    %6 = vector.load %arg3[%c0_4, %c0_5] : memref<8x1xf32, #tpu.memory_space<vmem>>, vector<8x1xf32>
    %7 = vector.broadcast %6 : vector<8x1xf32> to vector<8x256xf32>
    %8 = arith.addf %5, %7 : vector<8x256xf32>
    %cst = arith.constant 0.000000e+00 : f32
    %9 = vector.broadcast %cst : f32 to vector<8x256xf32>
    %10 = arith.maximumf %8, %9 : vector<8x256xf32>
    %c0_6 = arith.constant 0 : index
    %c0_7 = arith.constant 0 : index
    %c0_8 = arith.constant 0 : index
    %11 = vector.load %arg5[%c0_6, %c0_7, %c0_8] : memref<1x8x256xf32, #tpu.memory_space<vmem>>, vector<1x8x256xf32>
    %12 = vector.shape_cast %11 : vector<1x8x256xf32> to vector<8x256xf32>
    %13 = vector.shape_cast %10 : vector<8x256xf32> to vector<1x8x256xf32>
    tpu.vector_store %arg5[%c0_6, %c0_7, %c0_8], %13 {strides = array<i32>} : memref<1x8x256xf32, #tpu.memory_space<vmem>>, vector<1x8x256xf32>,
    %c255_i32 = arith.constant 255 : i32
    %14 = tpu.dynamic_rotate %10 by %c255_i32 dim 1 : vector<8x256xf32>, i32 -> vector<8x256xf32>
    %15 = arith.maximumf %10, %14 : vector<8x256xf32>
    %c240_i32 = arith.constant 240 : i32
    %16 = tpu.dynamic_rotate %15 by %c240_i32 dim 1 : vector<8x256xf32>, i32 -> vector<8x256xf32>
    %17 = arith.maximumf %15, %16 : vector<8x256xf32>
    %c0_9 = arith.constant 0 : index
    %c0_10 = arith.constant 0 : index
    %18 = vector.load %arg4[%c0_9, %c0_10] : memref<256x64xf32, #tpu.memory_space<vmem>>, vector<256x64xf32>
    %cst_11 = arith.constant dense<0.000000e+00> : vector<8x64xf32>
    %19 = tpu.matmul %17, %18, %cst_11 {dimension_numbers = #tpu.dot_dimension_numbers<[1], [0], [0], [1], [0, 0, 1, 1], [], []>} : vector<8x256xf32>, vector<256x64xf32>, vector<8x64xf32> -> vector<8x64xf32>
    %c0_12 = arith.constant 0 : index
    %c0_13 = arith.constant 0 : index
    %c0_14 = arith.constant 0 : index
    %20 = vector.load %arg6[%c0_12, %c0_13, %c0_14] : memref<1x8x64xf32, #tpu.memory_space<vmem>>, vector<1x8x64xf32>
    %21 = vector.shape_cast %20 : vector<1x8x64xf32> to vector<8x64xf32>
    %22 = vector.shape_cast %19 : vector<8x64xf32> to vector<1x8x64xf32>
    tpu.vector_store %arg6[%c0_12, %c0_13, %c0_14], %22 {strides = array<i32>} : memref<1x8x64xf32, #tpu.memory_space<vmem>>, vector<1x8x64xf32>,
    return
  }
  func.func @transform_0(%arg0: i32) -> (i32, i32, i32) {
    %c0_i32 = arith.constant 0 : i32
    %c0_i32_0 = arith.constant 0 : i32
    %c0_i32_1 = arith.constant 0 : i32
    return %arg0, %c0_i32, %c0_i32_0 : i32, i32, i32
  }
  func.func @transform_1(%arg0: i32) -> (i32, i32) {
    %c0_i32 = arith.constant 0 : i32
    %c0_i32_0 = arith.constant 0 : i32
    %c0_i32_1 = arith.constant 0 : i32
    return %c0_i32, %c0_i32_0 : i32, i32
  }
  func.func @transform_2(%arg0: i32) -> (i32, i32) {
    %c0_i32 = arith.constant 0 : i32
    %c0_i32_0 = arith.constant 0 : i32
    %c0_i32_1 = arith.constant 0 : i32
    return %c0_i32, %c0_i32_0 : i32, i32
  }
  func.func @transform_3(%arg0: i32) -> (i32, i32) {
    %c0_i32 = arith.constant 0 : i32
    %c0_i32_0 = arith.constant 0 : i32
    %c0_i32_1 = arith.constant 0 : i32
    return %c0_i32, %c0_i32_0 : i32, i32
  }
  func.func @transform_4(%arg0: i32) -> (i32, i32, i32) {
    %c0_i32 = arith.constant 0 : i32
    %c0_i32_0 = arith.constant 0 : i32
    %c0_i32_1 = arith.constant 0 : i32
    return %arg0, %c0_i32, %c0_i32_0 : i32, i32, i32
  }
  func.func @transform_5(%arg0: i32) -> (i32, i32, i32) {
    %c0_i32 = arith.constant 0 : i32
    %c0_i32_0 = arith.constant 0 : i32
    %c0_i32_1 = arith.constant 0 : i32
    return %arg0, %c0_i32, %c0_i32_0 : i32, i32, i32
  }
}

</mosaic_0001>

<llo_original>
// kernel: encoder_forward.4
$region0: #{encoder_forward.4}
  #allocation0 [shape = 'u32[]', space=smem, size = 0x4, offset = 0x4, fixed_abs, tag = 'smem constant byte address 0x4 - core index']
  #allocation1 [shape = 'u32[144,128]{1,0:T(1,128)}', space=vmem, size = 0x12000, scoped, tag = 'internal scratch']
  %s0 = inlined_call_operand.vmem [shape: bf16[2,8,256], index: 0, kind: input, shape index: {}]
  %s1 = inlined_call_operand.vmem [shape: f32[8,1], index: 1, kind: input, shape index: {}]
  %s2 = inlined_call_operand.vmem [shape: f32[8,1], index: 2, kind: input, shape index: {}]
  %s3 = inlined_call_operand.vmem [shape: bf16[8,72], index: 3, kind: input, shape index: {}]
  %s4 = inlined_call_operand.vmem [shape: f32[8,1], index: 4, kind: input, shape index: {}]
  %s5 = inlined_call_operand.vmem [shape: bf16[2,8,256], index: 5, kind: output, shape index: {0}]
  %s6 = inlined_call_operand.vmem [shape: f32[2,8,1], index: 6, kind: output, shape index: {1}]
  %s7 = inlined_call_operand.vmem [shape: f32[2,8,1], index: 7, kind: output, shape index: {2}]
  %8 = xla_tuple %s5, %s6, %s7
  %s9 = sld [smem:[#allocation0]]
  $region69: #{encoder_forward.4} parent=0
    _
  %s11 = ssub.s32 1, %s9
  %s12 = scalar_select 0, %s11, %s9
  loop: start=0, step=1, limit=4
  $region2: #{encoder_forward.4} parent=0 // loop_pre_header
    _
  $region3: #{encoder_forward.4} parent=0 // loop_header
    %s14 = sphi 0, %s18
    %p15 = scmp.ge.s32.totalorder %s14, 4
    %s24 = sphi 0, %s26
    %s27 = sphi 0, %s24
    %s28 = sphi 0, %s27
    %s44 = sphi 0, %s28
    %s48 = sphi 0, %s48
    %s50 = sphi 0, %s48
    %s51 = sphi 0, %s50
    %s65 = sphi 0, %s51
    %s69 = sphi 0, %s69
    %s71 = sphi 0, %s69
    %s72 = sphi 0, %s71
    %s86 = sphi 0, %s72
    %s90 = sphi 0, %s90
    %s92 = sphi 0, %s90
    %s93 = sphi 0, %s92
    %s107 = sphi 0, %s93
    %s111 = sphi 0, %s111
    %s113 = sphi 0, %s111
    %s114 = sphi 0, %s113
    %s128 = sphi 0, %s114
    %s134 = sphi 0, %s136
    %s137 = sphi 0, %s134
    %s138 = sphi 0, %s137
    %s154 = sphi 0, %s138
    %s160 = sphi 0, %s162
    %s163 = sphi 0, %s160
    %s164 = sphi 0, %s163
    %s180 = sphi 0, %s164
    %s186 = sphi 0, %s188
    %s189 = sphi 0, %s186
    %s190 = sphi 0, %s189
    %s206 = sphi 0, %s190
  $region4: #{encoder_forward.4} parent=0 // loop_header_branch
    %17 = sbr.rel (%p15) target = $region8
  $region5: #{encoder_forward.4} parent=0 // loop_body
    %s19 = ssub.s32 %s14, 1
    %s20 = ssub.s32 %s14, 2
    %s21 = sadd.s32 %s14, 1
    %s22 = ssub.s32 %s14, %s21
    %p23 = scmp.eq.s32.totalorder %s22, 0
    %s25 = sadd.s32 %s24, 1
    %s26 = scalar_select %p23, %s24, %s25
    %p29 = pneg %p23
    %p30 = scmp.eq.s32.totalorder %s14, 1
    %p31 = por %p29, %p30
    %p32 = scmp.ne.s32.totalorder %s24, %s27
    %p33 = scmp.eq.s32.totalorder %s14, 0
    %p34 = por %p32, %p33
    %p35 = scmp.ne.s32.totalorder %s24, %s27
    %p36 = scmp.eq.s32.totalorder %s19, 1
    %p37 = por %p35, %p36
    %p38 = scmp.ne.s32.totalorder %s27, %s28
    %p39 = scmp.eq.s32.totalorder %s19, 0
    %p40 = por %p38, %p39
    %p41 = scmp.ne.s32.totalorder %s27, %s28
    %p42 = scmp.eq.s32.totalorder %s20, 1
    %p43 = por %p41, %p42
    %p45 = scmp.ne.s32.totalorder %s28, %s44
    %p46 = scmp.eq.s32.totalorder %s20, 0
    %p47 = por %p45, %p46
    %s49 = sadd.s32 %s48, 1
    %p52 = scmp.eq.s32.totalorder %s14, 1
    %p53 = scmp.ne.s32.totalorder %s48, %s50
    %p54 = scmp.eq.s32.totalorder %s14, 0
    %p55 = por %p53, %p54
    %p56 = scmp.ne.s32.totalorder %s48, %s50
    %p57 = scmp.eq.s32.totalorder %s19, 1
    %p58 = por %p56, %p57
    %p59 = scmp.ne.s32.totalorder %s50, %s51
    %p60 = scmp.eq.s32.totalorder %s19, 0
    %p61 = por %p59, %p60
    %p62 = scmp.ne.s32.totalorder %s50, %s51
    %p63 = scmp.eq.s32.totalorder %s20, 1
    %p64 = por %p62, %p63
    %p66 = scmp.ne.s32.totalorder %s51, %s65
    %p67 = scmp.eq.s32.totalorder %s20, 0
    %p68 = por %p66, %p67
    %s70 = sadd.s32 %s69, 1
    %p73 = scmp.eq.s32.totalorder %s14, 1
    %p74 = scmp.ne.s32.totalorder %s69, %s71
    %p75 = scmp.eq.s32.totalorder %s14, 0
    %p76 = por %p74, %p75
    %p77 = scmp.ne.s32.totalorder %s69, %s71
    %p78 = scmp.eq.s32.totalorder %s19, 1
    %p79 = por %p77, %p78
    %p80 = scmp.ne.s32.totalorder %s71, %s72
    %p81 = scmp.eq.s32.totalorder %s19, 0
    %p82 = por %p80, %p81
    %p83 = scmp.ne.s32.totalorder %s71, %s72
    %p84 = scmp.eq.s32.totalorder %s20, 1
    %p85 = por %p83, %p84
    %p87 = scmp.ne.s32.totalorder %s72, %s86
    %p88 = scmp.eq.s32.totalorder %s20, 0
    %p89 = por %p87, %p88
    %s91 = sadd.s32 %s90, 1
    %p94 = scmp.eq.s32.totalorder %s14, 1
    %p95 = scmp.ne.s32.totalorder %s90, %s92
    %p96 = scmp.eq.s32.totalorder %s14, 0
    %p97 = por %p95, %p96
    %p98 = scmp.ne.s32.totalorder %s90, %s92
    %p99 = scmp.eq.s32.totalorder %s19, 1
    %p100 = por %p98, %p99
    %p101 = scmp.ne.s32.totalorder %s92, %s93
    %p102 = scmp.eq.s32.totalorder %s19, 0
    %p103 = por %p101, %p102
    %p104 = scmp.ne.s32.totalorder %s92, %s93
    %p105 = scmp.eq.s32.totalorder %s20, 1
    %p106 = por %p104, %p105
    %p108 = scmp.ne.s32.totalorder %s93, %s107
    %p109 = scmp.eq.s32.totalorder %s20, 0
    %p110 = por %p108, %p109
    %s112 = sadd.s32 %s111, 1
    %p115 = scmp.eq.s32.totalorder %s14, 1
    %p116 = scmp.ne.s32.totalorder %s111, %s113
    %p117 = scmp.eq.s32.totalorder %s14, 0
    %p118 = por %p116, %p117
    %p119 = scmp.ne.s32.totalorder %s111, %s113
    %p120 = scmp.eq.s32.totalorder %s19, 1
    %p121 = por %p119, %p120
    %p122 = scmp.ne.s32.totalorder %s113, %s114
    %p123 = scmp.eq.s32.totalorder %s19, 0
    %p124 = por %p122, %p123
    %p125 = scmp.ne.s32.totalorder %s113, %s114
    %p126 = scmp.eq.s32.totalorder %s20, 1
    %p127 = por %p125, %p126
    %p129 = scmp.ne.s32.totalorder %s114, %s128
    %p130 = scmp.eq.s32.totalorder %s20, 0
    %p131 = por %p129, %p130
    %s132 = ssub.s32 %s14, %s21
    %p133 = scmp.eq.s32.totalorder %s132, 0
    %s135 = sadd.s32 %s134, 1
    %s136 = scalar_select %p133, %s134, %s135
    %p139 = pneg %p133
    %p140 = scmp.eq.s32.totalorder %s14, 1
    %p141 = por %p139, %p140
    %p142 = scmp.ne.s32.totalorder %s134, %s137
    %p143 = scmp.eq.s32.totalorder %s14, 0
    %p144 = por %p142, %p143
    %p145 = scmp.ne.s32.totalorder %s134, %s137
    %p146 = scmp.eq.s32.totalorder %s19, 1
    %p147 = por %p145, %p146
    %p148 = scmp.ne.s32.totalorder %s137, %s138
    %p149 = scmp.eq.s32.totalorder %s19, 0
    %p150 = por %p148, %p149
    %p151 = scmp.ne.s32.totalorder %s137, %s138
    %p152 = scmp.eq.s32.totalorder %s20, 1
    %p153 = por %p151, %p152
    %p155 = scmp.ne.s32.totalorder %s138, %s154
    %p156 = scmp.eq.s32.totalorder %s20, 0
    %p157 = por %p155, %p156
    %s158 = ssub.s32 %s14, %s21
    %p159 = scmp.eq.s32.totalorder %s158, 0
    %s161 = sadd.s32 %s160, 1
    %s162 = scalar_select %p159, %s160, %s161
    %p165 = pneg %p159
    %p166 = scmp.eq.s32.totalorder %s14, 1
    %p167 = por %p165, %p166
    %p168 = scmp.ne.s32.totalorder %s160, %s163
    %p169 = scmp.eq.s32.totalorder %s14, 0
    %p170 = por %p168, %p169
    %p171 = scmp.ne.s32.totalorder %s160, %s163
    %p172 = scmp.eq.s32.totalorder %s19, 1
    %p173 = por %p171, %p172
    %p174 = scmp.ne.s32.totalorder %s163, %s164
    %p175 = scmp.eq.s32.totalorder %s19, 0
    %p176 = por %p174, %p175
    %p177 = scmp.ne.s32.totalorder %s163, %s164
    %p178 = scmp.eq.s32.totalorder %s20, 1
    %p179 = por %p177, %p178
    %p181 = scmp.ne.s32.totalorder %s164, %s180
    %p182 = scmp.eq.s32.totalorder %s20, 0
    %p183 = por %p181, %p182
    %s184 = ssub.s32 %s14, %s21
    %p185 = scmp.eq.s32.totalorder %s184, 0
    %s187 = sadd.s32 %s186, 1
    %s188 = scalar_select %p185, %s186, %s187
    %p191 = pneg %p185
    %p192 = scmp.eq.s32.totalorder %s14, 1
    %p193 = por %p191, %p192
    %p194 = scmp.ne.s32.totalorder %s186, %s189
    %p195 = scmp.eq.s32.totalorder %s14, 0
    %p196 = por %p194, %p195
    %p197 = scmp.ne.s32.totalorder %s186, %s189
    %p198 = scmp.eq.s32.totalorder %s19, 1
    %p199 = por %p197, %p198
    %p200 = scmp.ne.s32.totalorder %s189, %s190
    %p201 = scmp.eq.s32.totalorder %s19, 0
    %p202 = por %p200, %p201
    %p203 = scmp.ne.s32.totalorder %s189, %s190
    %p204 = scmp.eq.s32.totalorder %s20, 1
    %p205 = por %p203, %p204
    %p207 = scmp.ne.s32.totalorder %s190, %s206
    %p208 = scmp.eq.s32.totalorder %s20, 0
    %p209 = por %p207, %p208
    %p210 = scmp.le.s32.totalorder 1, %s14
    %p211 = scmp.lt.s32.totalorder %s14, 3
    %p212 = pnand %p210, %p211
    %p213 = pneg %p212
    // Predicated region
    $region9: #{encoder_forward.4} parent=5 // pred_check
      _
    $region10: #{encoder_forward.4} parent=5 // pred_check_branch
      %215 = sbr.rel (%p212) target = $region12
    $region11: #{encoder_forward.4} parent=5 // pred_region
      %s216 = ssub.s32 %s14, 1
      // Predicated region
      $region13: #{encoder_forward.4} parent=11 // pred_check
        %p217 = pneg %p61
      $region14: #{encoder_forward.4} parent=11 // pred_check_branch
        %219 = sbr.rel (%p217) target = $region16
      $region15: #{encoder_forward.4} parent=11 // pred_region
        _
      $region16: #{encoder_forward.4} parent=11 // pred_fallthru
        _
      // Predicated region
      $region17: #{encoder_forward.4} parent=11 // pred_check
        %p220 = pneg %p82
      $region18: #{encoder_forward.4} parent=11 // pred_check_branch
        %222 = sbr.rel (%p220) target = $region20
      $region19: #{encoder_forward.4} parent=11 // pred_region
        _
      $region20: #{encoder_forward.4} parent=11 // pred_fallthru
        _
      // Predicated region
      $region21: #{encoder_forward.4} parent=11 // pred_check
        %p223 = pneg %p103
      $region22: #{encoder_forward.4} parent=11 // pred_check_branch
        %225 = sbr.rel (%p223) target = $region24
      $region23: #{encoder_forward.4} parent=11 // pred_region
        _
      $region24: #{encoder_forward.4} parent=11 // pred_fallthru
        _
      // Predicated region
      $region25: #{encoder_forward.4} parent=11 // pred_check
        %p226 = pneg %p124
      $region26: #{encoder_forward.4} parent=11 // pred_check_branch
        %228 = sbr.rel (%p226) target = $region28
      $region27: #{encoder_forward.4} parent=11 // pred_region
        _
      $region28: #{encoder_forward.4} parent=11 // pred_fallthru
        _
    $region12: #{encoder_forward.4} parent=5 // pred_fallthru
      _
    %p229 = scmp.lt.s32.totalorder %s14, 2
    // Predicated region
    $region29: #{encoder_forward.4} parent=5 // pred_check
      %p230 = pneg %p229
    $region30: #{encoder_forward.4} parent=5 // pred_check_branch
      %232 = sbr.rel (%p230) target = $region32
    $region31: #{encoder_forward.4} parent=5 // pred_region
      // Predicated region
      $region33: #{encoder_forward.4} parent=31 // pred_check
        %p233 = pneg %p34
      $region34: #{encoder_forward.4} parent=31 // pred_check_branch
        %235 = sbr.rel (%p233) target = $region36
      $region35: #{encoder_forward.4} parent=31 // pred_region
        %p236 = scmp.lt.s32.totalorder %s14, 1
        %s237 = scalar_select %p236, %s14, 1
        %s238 = smul.addr %s237, 2
        %s239 = smul.addr %s238, 4
        %s240 = scalar_lea.vmem %s0, %s239
      $region36: #{encoder_forward.4} parent=31 // pred_fallthru
        _
    $region32: #{encoder_forward.4} parent=5 // pred_fallthru
      _
    %p241 = scmp.le.s32.totalorder 1, %s14
    %p242 = scmp.lt.s32.totalorder %s14, 3
    %p243 = pnand %p241, %p242
    %p244 = pneg %p243
    // Predicated region
    $region37: #{encoder_forward.4} parent=5 // pred_check
      _
    $region38: #{encoder_forward.4} parent=5 // pred_check_branch
      %246 = sbr.rel (%p243) target = $region40
    $region39: #{encoder_forward.4} parent=5 // pred_region
      %s247 = ssub.s32 %s14, 1
      %p248 = scmp.lt.s32.totalorder %s19, 1
      %s249 = scalar_select %p248, %s19, 1
      %s250 = smul.addr %s249, 2
      %s251 = smul.addr %s250, 4
      %s252 = scalar_lea.vmem %s0, %s251
      %p253 = pneg %p40
      %p254 = pneg %p37
      %p255 = pneg %p61
      %p256 = pneg %p58
      %p257 = pneg %p82
      %p258 = pneg %p79
      %p259 = pneg %p103
      %p260 = pneg %p100
      %p261 = pneg %p124
      %p262 = pneg %p121
      %p263 = pneg %p150
      %p264 = pneg %p147
      %p265 = scmp.lt.s32.totalorder %s19, 1
      %s266 = scalar_select %p265, %s19, 1
      %s267 = smul.addr %s266, 2
      %s268 = smul.addr %s267, 4
      %s269 = scalar_lea.vmem %s5, %s268
      %p270 = pneg %p176
      %p271 = pneg %p173
      %p272 = scmp.lt.s32.totalorder %s19, 1
      %s273 = scalar_select %p272, %s19, 1
      %s274 = smul.addr %s273, 8
      %s275 = scalar_lea.vmem %s6, %s274
      %p276 = pneg %p202
      %p277 = pneg %p199
      %p278 = scmp.lt.s32.totalorder %s19, 1
      %s279 = scalar_select %p278, %s19, 1
      %s280 = smul.addr %s279, 8
      %s281 = scalar_lea.vmem %s7, %s280
      %p282 = scmp.lt.s32.totalorder %s19, 1
      %s283 = scalar_select %p282, %s19, 1
      %s284 = smul.addr %s283, 2
      %s285 = smul.addr %s284, 4
      %s286 = scalar_lea.vmem %s0, %s285
      %p287 = scmp.lt.s32.totalorder %s19, 1
      %s288 = scalar_select %p287, %s19, 1
      %s289 = smul.addr %s288, 2
      %s290 = smul.addr %s289, 4
      %s291 = scalar_lea.vmem %s5, %s290
      %p292 = scmp.lt.s32.totalorder %s19, 1
      %s293 = scalar_select %p292, %s19, 1
      %s294 = smul.addr %s293, 8
      %s295 = scalar_lea.vmem %s6, %s294
      %p296 = scmp.lt.s32.totalorder %s19, 1
      %s297 = scalar_select %p296, %s19, 1
      %s298 = smul.addr %s297, 8
      %s299 = scalar_lea.vmem %s7, %s298
      %v301 = vld [vmem:[%s286] sm:$0xff]
      %v302 = vunpack.c.l.bf16 %v301
      %v303 = vunpack.c.h.bf16 %v301
      %v304 = vld [vmem:[%s1] sm:$0xff]
      %306 = vset.pattern.permute.xlu0 0
      %307 = vperm.xlu0 %306, %v304
      %v308 = vpop.permute.xlu0 %307
      %v310 = vmul.f32 %v302, %v308
      %v311 = vmul.f32 %v303, %v308
      %v312 = vld [vmem:[%s2] sm:$0xff]
      %314 = vset.pattern.permute.xlu0 0
      %315 = vperm.xlu0 %314, %v312
      %v316 = vpop.permute.xlu0 %315
      %v318 = vadd.f32 %v310, %v316
      %v319 = vadd.f32 %v311, %v316
      %v320 = vmax.f32 %v318, 0.0
      %v321 = vmax.f32 %v319, 0.0
      %v322 = vlaneseq
      %v323 = vand.u32 %v322, 127
      %v324 = vadd.s32 %v323, 128
      %v325 = vand.u32 %v323, 15
      %v326 = vand.u32 %v324, 15
      %327 = vrot.lane.b32.xlu0 %v320, 17
      %v328 = vpop.permute.xlu0 %327
      %329 = vrot.lane.b32.xlu0 %v321, 17
      %v330 = vpop.permute.xlu0 %329
      %vm331 = vcmp.lt.s32.totalorder %v323, 17
      %v332 = vsel %vm331, %v328, %v330
      %v333 = vsel %vm331, %v330, %v328
      %vm334 = vcmp.ge.s32.totalorder %v323, 16
      %vm335 = vcmp.ge.s32.totalorder %v324, 16
      %vm336 = vcmp.ge.s32.totalorder %v325, 1
      %vm337 = vcmp.ge.s32.totalorder %v326, 1
      %vm338 = vmand %vm334, %vm336
      %vm339 = vmand %vm335, %vm337
      %v340 = vsel %vm338, 1, 0
      %v341 = vsel %vm339, 1, 0
      %v342 = vcvt.s32.f32 %v340
      %v343 = vcvt.s32.f32 %v341
      %v344 = vmul.f32 %v333, %v342
      %v345 = vmul.f32 %v332, %v343
      %346 = vrot.lane.b32.xlu0 %v320, 16
      %v347 = vpop.permute.xlu0 %346
      %348 = vrot.lane.b32.xlu0 %v321, 16
      %v349 = vpop.permute.xlu0 %348
      %vm350 = vcmp.lt.s32.totalorder %v323, 16
      %v351 = vsel %vm350, %v347, %v349
      %v352 = vsel %vm350, %v349, %v347
      %v353 = vsel %vm334, 1, 0
      %v354 = vsel %vm335, 1, 0
      %v355 = vcvt.s32.f32 %v353
      %v356 = vcvt.s32.f32 %v354
      %v357 = vmul.f32 %v352, %v355
      %v358 = vmul.f32 %v351, %v356
      %359 = vrot.lane.b32.xlu0 %v320, 15
      %v360 = vpop.permute.xlu0 %359
      %361 = vrot.lane.b32.xlu0 %v321, 15
      %v362 = vpop.permute.xlu0 %361
      %vm363 = vcmp.lt.s32.totalorder %v323, 15
      %v364 = vsel %vm363, %v360, %v362
      %v365 = vsel %vm363, %v362, %v360
      %vm366 = vcmp.lt.s32.totalorder %v325, 15
      %vm367 = vcmp.lt.s32.totalorder %v326, 15
      %vm368 = vmand %vm334, %vm366
      %vm369 = vmand %vm335, %vm367
      %v370 = vsel %vm368, 1, 0
      %v371 = vsel %vm369, 1, 0
      %v372 = vcvt.s32.f32 %v370
      %v373 = vcvt.s32.f32 %v371
      %v374 = vmul.f32 %v365, %v372
      %v375 = vmul.f32 %v364, %v373
      %376 = vrot.lane.b32.xlu0 %v320, 1
      %v377 = vpop.permute.xlu0 %376
      %378 = vrot.lane.b32.xlu0 %v321, 1
      %v379 = vpop.permute.xlu0 %378
      %vm380 = vcmp.lt.s32.totalorder %v323, 1
      %v381 = vsel %vm380, %v377, %v379
      %v382 = vsel %vm380, %v379, %v377
      %v383 = vsel %vm336, 1, 0
      %v384 = vsel %vm337, 1, 0
      %v385 = vcvt.s32.f32 %v383
      %v386 = vcvt.s32.f32 %v384
      %v387 = vmul.f32 %v382, %v385
      %v388 = vmul.f32 %v381, %v386
      %389 = vrot.lane.b32.xlu0 %v320, 127
      %v390 = vpop.permute.xlu0 %389
      %391 = vrot.lane.b32.xlu0 %v321, 127
      %v392 = vpop.permute.xlu0 %391
      %vm393 = vcmp.lt.s32.totalorder %v323, 127
      %v394 = vsel %vm393, %v390, %v392
      %v395 = vsel %vm393, %v392, %v390
      %v396 = vsel %vm366, 1, 0
      %v397 = vsel %vm367, 1, 0
      %v398 = vcvt.s32.f32 %v396
      %v399 = vcvt.s32.f32 %v397
      %v400 = vmul.f32 %v394, %v398
      %v401 = vmul.f32 %v395, %v399
      %402 = vrot.lane.b32.xlu0 %v320, 113
      %v403 = vpop.permute.xlu0 %402
      %404 = vrot.lane.b32.xlu0 %v321, 113
      %v405 = vpop.permute.xlu0 %404
      %vm406 = vcmp.lt.s32.totalorder %v323, 113
      %v407 = vsel %vm406, %v403, %v405
      %v408 = vsel %vm406, %v405, %v403
      %vm409 = vcmp.lt.s32.totalorder %v323, 240
      %vm410 = vcmp.lt.s32.totalorder %v324, 240
      %vm411 = vmand %vm409, %vm336
      %vm412 = vmand %vm410, %vm337
      %v413 = vsel %vm411, 1, 0
      %v414 = vsel %vm412, 1, 0
      %v415 = vcvt.s32.f32 %v413
      %v416 = vcvt.s32.f32 %v414
      %v417 = vmul.f32 %v407, %v415
      %v418 = vmul.f32 %v408, %v416
      %419 = vrot.lane.b32.xlu0 %v320, 112
      %v420 = vpop.permute.xlu0 %419
      %421 = vrot.lane.b32.xlu0 %v321, 112
      %v422 = vpop.permute.xlu0 %421
      %vm423 = vcmp.lt.s32.totalorder %v323, 112
      %v424 = vsel %vm423, %v420, %v422
      %v425 = vsel %vm423, %v422, %v420
      %v426 = vsel %vm409, 1, 0
      %v427 = vsel %vm410, 1, 0
      %v428 = vcvt.s32.f32 %v426
      %v429 = vcvt.s32.f32 %v427
      %v430 = vmul.f32 %v424, %v428
      %v431 = vmul.f32 %v425, %v429
      %432 = vrot.lane.b32.xlu0 %v320, 111
      %v433 = vpop.permute.xlu0 %432
      %434 = vrot.lane.b32.xlu0 %v321, 111
      %v435 = vpop.permute.xlu0 %434
      %vm436 = vcmp.lt.s32.totalorder %v323, 111
      %v437 = vsel %vm436, %v433, %v435
      %v438 = vsel %vm436, %v435, %v433
      %vm439 = vmand %vm409, %vm366
      %vm440 = vmand %vm410, %vm367
      %v441 = vsel %vm439, 1, 0
      %v442 = vsel %vm440, 1, 0
      %v443 = vcvt.s32.f32 %v441
      %v444 = vcvt.s32.f32 %v442
      %v445 = vmul.f32 %v437, %v443
      %v446 = vmul.f32 %v438, %v444
      %v447 = vpack.c.bf16 %v357, %v344
      %v448 = vpack.c.bf16 %v358, %v345
      %v449 = vpack.c.bf16 %v387, %v374
      %v450 = vpack.c.bf16 %v388, %v375
      %v451 = vpack.c.bf16 %v400, %v320
      %v452 = vpack.c.bf16 %v401, %v321
      %v453 = vpack.c.bf16 %v430, %v417
      %v454 = vpack.c.bf16 %v431, %v418
      %v455 = vpack.c.bf16 %v445, %v445
      %v456 = vpack.c.bf16 %v446, %v446
      %v457 = vld [vmem:[%s3] sm:$0xf]
      %v458 = vld [vmem:[%s4] sm:$0xff]
      %460 = vset.pattern.permute.xlu0 0
      %461 = vperm.xlu0 %460, %v458
      %v462 = vpop.permute.xlu0 %461
      %vm464 = vcmask 588800
      %v466 = vsel %vm464, %v457, 0
      %vm468 = vcmask 1043456
      %v470 = vsel %vm468, %v455, 0
      %v473 = vsel %vm468, %v456, 0
      %475 = vmatprep.subr.bf16.mxu0 %v448
      %476 = vmatpush1.bf16.msra.mxu0 %v447
      %477 = vmatprep.subr.bf16.mxu0 %v450
      %478 = vmatpush1.bf16.msra.mxu0 %v449
      %479 = vmatprep.subr.bf16.mxu0 %v452
      %480 = vmatpush1.bf16.msra.mxu0 %v451
      %481 = vmatprep.subr.bf16.mxu0 %v454
      %482 = vmatpush1.bf16.msra.mxu0 %v453
      %483 = vmatprep.subr.bf16.mxu0 %v473
      %484 = vmatpush1.bf16.msra.mxu0 %v470
      %485 = vmatprep.subr.bf16.mxu0 0
      %486 = vmatpush1.bf16.msra.mxu0 0
      %487 = vmatprep.subr.bf16.mxu0 0
      %488 = vmatpush1.bf16.msra.mxu0 0
      %489 = vmatprep.subr.bf16.mxu0 0
      %490 = vmatpush1.bf16.msra.mxu0 0
      %491 = vmatprep.subr.bf16.mxu0 0
      %492 = vmatpush1.bf16.msra.mxu0 0
      %493 = vmatprep.subr.bf16.mxu0 0
      %494 = vmatpush1.bf16.msra.mxu0 0
      %495 = vmatprep.subr.bf16.mxu0 0
      %496 = vmatpush1.bf16.msra.mxu0 0
      %497 = vmatprep.subr.bf16.mxu0 0
      %498 = vmatpush1.bf16.msra.mxu0 0
      %499 = vmatprep.subr.bf16.mxu0 0
      %500 = vmatpush1.bf16.msra.mxu0 0
      %501 = vmatprep.subr.bf16.mxu0 0
      %502 = vmatpush1.bf16.msra.mxu0 0
      %503 = vmatprep.subr.bf16.mxu0 0
      %504 = vmatpush1.bf16.msra.mxu0 0
      %505 = vmatprep.subr.bf16.mxu0 0
      %506 = vmatpush1.bf16.msra.mxu0 0
      %507 = vmatprep.mubr.bf16.mxu0 0
      %508 = vmatmul.mubr.bf16.gmra.mrb[0].mxu0 %v466
      %v509 = vpop.f32.mrb[0].mxu0
      %v510 = vadd.f32 %v462, %v509
      %v511 = vpop.f32.mrb[0].mxu0
      %v512 = vadd.f32 %v462, %v511
      %v513 = vpop.f32.mrb[0].mxu0
      %v514 = vpop.f32.mrb[0].mxu0
      %515 = vdwg.mxu0
      %v516 = vpack.c.bf16 %v510, %v510
      %v517 = vpack.c.bf16 %v512, %v512
      %v520 = vunpack.c.l.b16 %v516
      %v521 = vunpack.c.l.b16 %v517
      %v522 = vpack.c.b16 %v521, %v520
      %524 = vst [vmem:[%s291] sm:$0xff] %v522
      %v525 = vadd.f32 %v510, %v512
      %526 = vadd.xlane.f32.xlu0 %v525
      %v527 = vpop.xlane.xlu0 %526
      %vm528 = vcmask 7168
      %529 = vst.msk [vmem:[%s295] sm:$0xff] %vm528, %v527
      %v530 = vmul.f32 %v510, %v510
      %v531 = vmul.f32 %v512, %v512
      %v532 = vadd.f32 %v530, %v531
      %533 = vadd.xlane.f32.xlu0 %v532
      %v534 = vpop.xlane.xlu0 %533
      %535 = vst.msk [vmem:[%s299] sm:$0xff] %vm528, %v534
      %p536 = scmp.lt.s32.totalorder %s19, 1
      %s537 = scalar_select %p536, %s19, 1
      %s538 = smul.addr %s537, 2
      %s539 = smul.addr %s538, 4
      %s540 = scalar_lea.vmem %s5, %s539
      %p541 = scmp.lt.s32.totalorder %s19, 1
      %s542 = scalar_select %p541, %s19, 1
      %s543 = smul.addr %s542, 8
      %s544 = scalar_lea.vmem %s6, %s543
      %p545 = scmp.lt.s32.totalorder %s19, 1
      %s546 = scalar_select %p545, %s19, 1
      %s547 = smul.addr %s546, 8
      %s548 = scalar_lea.vmem %s7, %s547
      // Predicated region
      $region41: #{encoder_forward.4} parent=39 // pred_check
        %p549 = pneg %p147
      $region42: #{encoder_forward.4} parent=39 // pred_check_branch
        %551 = sbr.rel (%p549) target = $region44
      $region43: #{encoder_forward.4} parent=39 // pred_region
        _
      $region44: #{encoder_forward.4} parent=39 // pred_fallthru
        _
      // Predicated region
      $region45: #{encoder_forward.4} parent=39 // pred_check
        %p552 = pneg %p173
      $region46: #{encoder_forward.4} parent=39 // pred_check_branch
        %554 = sbr.rel (%p552) target = $region48
      $region47: #{encoder_forward.4} parent=39 // pred_region
        _
      $region48: #{encoder_forward.4} parent=39 // pred_fallthru
        _
      // Predicated region
      $region49: #{encoder_forward.4} parent=39 // pred_check
        %p555 = pneg %p199
      $region50: #{encoder_forward.4} parent=39 // pred_check_branch
        %557 = sbr.rel (%p555) target = $region52
      $region51: #{encoder_forward.4} parent=39 // pred_region
        _
      $region52: #{encoder_forward.4} parent=39 // pred_fallthru
        _
    $region40: #{encoder_forward.4} parent=5 // pred_fallthru
      _
    %p558 = scmp.le.s32.totalorder 2, %s14
    // Predicated region
    $region53: #{encoder_forward.4} parent=5 // pred_check
      %p559 = pneg %p558
    $region54: #{encoder_forward.4} parent=5 // pred_check_branch
      %561 = sbr.rel (%p559) target = $region56
    $region55: #{encoder_forward.4} parent=5 // pred_region
      %s562 = ssub.s32 %s14, 2
      // Predicated region
      $region57: #{encoder_forward.4} parent=55 // pred_check
        %p563 = pneg %p153
      $region58: #{encoder_forward.4} parent=55 // pred_check_branch
        %565 = sbr.rel (%p563) target = $region60
      $region59: #{encoder_forward.4} parent=55 // pred_region
        %p566 = scmp.lt.s32.totalorder %s20, 1
        %s567 = scalar_select %p566, %s20, 1
        %s568 = smul.addr %s567, 2
        %s569 = smul.addr %s568, 4
        %s570 = scalar_lea.vmem %s5, %s569
      $region60: #{encoder_forward.4} parent=55 // pred_fallthru
        _
      // Predicated region
      $region61: #{encoder_forward.4} parent=55 // pred_check
        %p571 = pneg %p179
      $region62: #{encoder_forward.4} parent=55 // pred_check_branch
        %573 = sbr.rel (%p571) target = $region64
      $region63: #{encoder_forward.4} parent=55 // pred_region
        %p574 = scmp.lt.s32.totalorder %s20, 1
        %s575 = scalar_select %p574, %s20, 1
        %s576 = smul.addr %s575, 8
        %s577 = scalar_lea.vmem %s6, %s576
      $region64: #{encoder_forward.4} parent=55 // pred_fallthru
        _
      // Predicated region
      $region65: #{encoder_forward.4} parent=55 // pred_check
        %p578 = pneg %p205
      $region66: #{encoder_forward.4} parent=55 // pred_check_branch
        %580 = sbr.rel (%p578) target = $region68
      $region67: #{encoder_forward.4} parent=55 // pred_region
        %p581 = scmp.lt.s32.totalorder %s20, 1
        %s582 = scalar_select %p581, %s20, 1
        %s583 = smul.addr %s582, 8
        %s584 = scalar_lea.vmem %s7, %s583
      $region68: #{encoder_forward.4} parent=55 // pred_fallthru
        _
    $region56: #{encoder_forward.4} parent=5 // pred_fallthru
      _
  $region6: #{encoder_forward.4} parent=0 // loop_footer
    %s18 = sadd.s32 1, %s14
  $region7: #{encoder_forward.4} parent=0 // loop_footer_branch
    %13 = sbr.rel target = $region3
  $region8: #{encoder_forward.4} parent=0 // loop_exit
    _

// kernel: encoder_forward.3
$region0: #{encoder_forward.3}
  #allocation0 [shape = 'u32[]', space=smem, size = 0x4, offset = 0x4, fixed_abs, tag = 'smem constant byte address 0x4 - core index']
  #allocation1 [shape = 'u32[144,128]{1,0:T(1,128)}', space=vmem, size = 0x12000, scoped, tag = 'internal scratch']
  %s0 = inlined_call_operand.vmem [shape: f32[2,4,256], index: 0, kind: input, shape index: {}]
  %s1 = inlined_call_operand.vmem [shape: f32[4,1], index: 1, kind: input, shape index: {}]
  %s2 = inlined_call_operand.vmem [shape: f32[4,1], index: 2, kind: input, shape index: {}]
  %s3 = inlined_call_operand.vmem [shape: bf16[8,36], index: 3, kind: input, shape index: {}]
  %s4 = inlined_call_operand.vmem [shape: f32[8,1], index: 4, kind: input, shape index: {}]
  %s5 = inlined_call_operand.vmem [shape: bf16[2,8,256], index: 5, kind: output, shape index: {0}]
  %s6 = inlined_call_operand.vmem [shape: f32[2,8,1], index: 6, kind: output, shape index: {1}]
  %s7 = inlined_call_operand.vmem [shape: f32[2,8,1], index: 7, kind: output, shape index: {2}]
  %8 = xla_tuple %s5, %s6, %s7
  %s9 = sld [smem:[#allocation0]]
  $region69: #{encoder_forward.3} parent=0
    _
  %s11 = ssub.s32 1, %s9
  %s12 = scalar_select 0, %s11, %s9
  loop: start=0, step=1, limit=4
  $region2: #{encoder_forward.3} parent=0 // loop_pre_header
    _
  $region3: #{encoder_forward.3} parent=0 // loop_header
    %s14 = sphi 0, %s18
    %p15 = scmp.ge.s32.totalorder %s14, 4
    %s24 = sphi 0, %s26
    %s27 = sphi 0, %s24
    %s28 = sphi 0, %s27
    %s44 = sphi 0, %s28
    %s48 = sphi 0, %s48
    %s50 = sphi 0, %s48
    %s51 = sphi 0, %s50
    %s65 = sphi 0, %s51
    %s69 = sphi 0, %s69
    %s71 = sphi 0, %s69
    %s72 = sphi 0, %s71
    %s86 = sphi 0, %s72
    %s90 = sphi 0, %s90
    %s92 = sphi 0, %s90
    %s93 = sphi 0, %s92
    %s107 = sphi 0, %s93
    %s111 = sphi 0, %s111
    %s113 = sphi 0, %s111
    %s114 = sphi 0, %s113
    %s128 = sphi 0, %s114
    %s134 = sphi 0, %s136
    %s137 = sphi 0, %s134
    %s138 = sphi 0, %s137
    %s154 = sphi 0, %s138
    %s160 = sphi 0, %s162
    %s163 = sphi 0, %s160
    %s164 = sphi 0, %s163
    %s180 = sphi 0, %s164
    %s186 = sphi 0, %s188
    %s189 = sphi 0, %s186
    %s190 = sphi 0, %s189
    %s206 = sphi 0, %s190
  $region4: #{encoder_forward.3} parent=0 // loop_header_branch
    %17 = sbr.rel (%p15) target = $region8
  $region5: #{encoder_forward.3} parent=0 // loop_body
    %s19 = ssub.s32 %s14, 1
    %s20 = ssub.s32 %s14, 2
    %s21 = sadd.s32 %s14, 1
    %s22 = ssub.s32 %s14, %s21
    %p23 = scmp.eq.s32.totalorder %s22, 0
    %s25 = sadd.s32 %s24, 1
    %s26 = scalar_select %p23, %s24, %s25
    %p29 = pneg %p23
    %p30 = scmp.eq.s32.totalorder %s14, 1
    %p31 = por %p29, %p30
    %p32 = scmp.ne.s32.totalorder %s24, %s27
    %p33 = scmp.eq.s32.totalorder %s14, 0
    %p34 = por %p32, %p33
    %p35 = scmp.ne.s32.totalorder %s24, %s27
    %p36 = scmp.eq.s32.totalorder %s19, 1
    %p37 = por %p35, %p36
    %p38 = scmp.ne.s32.totalorder %s27, %s28
    %p39 = scmp.eq.s32.totalorder %s19, 0
    %p40 = por %p38, %p39
    %p41 = scmp.ne.s32.totalorder %s27, %s28
    %p42 = scmp.eq.s32.totalorder %s20, 1
    %p43 = por %p41, %p42
    %p45 = scmp.ne.s32.totalorder %s28, %s44
    %p46 = scmp.eq.s32.totalorder %s20, 0
    %p47 = por %p45, %p46
    %s49 = sadd.s32 %s48, 1
    %p52 = scmp.eq.s32.totalorder %s14, 1
    %p53 = scmp.ne.s32.totalorder %s48, %s50
    %p54 = scmp.eq.s32.totalorder %s14, 0
    %p55 = por %p53, %p54
    %p56 = scmp.ne.s32.totalorder %s48, %s50
    %p57 = scmp.eq.s32.totalorder %s19, 1
    %p58 = por %p56, %p57
    %p59 = scmp.ne.s32.totalorder %s50, %s51
    %p60 = scmp.eq.s32.totalorder %s19, 0
    %p61 = por %p59, %p60
    %p62 = scmp.ne.s32.totalorder %s50, %s51
    %p63 = scmp.eq.s32.totalorder %s20, 1
    %p64 = por %p62, %p63
    %p66 = scmp.ne.s32.totalorder %s51, %s65
    %p67 = scmp.eq.s32.totalorder %s20, 0
    %p68 = por %p66, %p67
    %s70 = sadd.s32 %s69, 1
    %p73 = scmp.eq.s32.totalorder %s14, 1
    %p74 = scmp.ne.s32.totalorder %s69, %s71
    %p75 = scmp.eq.s32.totalorder %s14, 0
    %p76 = por %p74, %p75
    %p77 = scmp.ne.s32.totalorder %s69, %s71
    %p78 = scmp.eq.s32.totalorder %s19, 1
    %p79 = por %p77, %p78
    %p80 = scmp.ne.s32.totalorder %s71, %s72
    %p81 = scmp.eq.s32.totalorder %s19, 0
    %p82 = por %p80, %p81
    %p83 = scmp.ne.s32.totalorder %s71, %s72
    %p84 = scmp.eq.s32.totalorder %s20, 1
    %p85 = por %p83, %p84
    %p87 = scmp.ne.s32.totalorder %s72, %s86
    %p88 = scmp.eq.s32.totalorder %s20, 0
    %p89 = por %p87, %p88
    %s91 = sadd.s32 %s90, 1
    %p94 = scmp.eq.s32.totalorder %s14, 1
    %p95 = scmp.ne.s32.totalorder %s90, %s92
    %p96 = scmp.eq.s32.totalorder %s14, 0
    %p97 = por %p95, %p96
    %p98 = scmp.ne.s32.totalorder %s90, %s92
    %p99 = scmp.eq.s32.totalorder %s19, 1
    %p100 = por %p98, %p99
    %p101 = scmp.ne.s32.totalorder %s92, %s93
    %p102 = scmp.eq.s32.totalorder %s19, 0
    %p103 = por %p101, %p102
    %p104 = scmp.ne.s32.totalorder %s92, %s93
    %p105 = scmp.eq.s32.totalorder %s20, 1
    %p106 = por %p104, %p105
    %p108 = scmp.ne.s32.totalorder %s93, %s107
    %p109 = scmp.eq.s32.totalorder %s20, 0
    %p110 = por %p108, %p109
    %s112 = sadd.s32 %s111, 1
    %p115 = scmp.eq.s32.totalorder %s14, 1
    %p116 = scmp.ne.s32.totalorder %s111, %s113
    %p117 = scmp.eq.s32.totalorder %s14, 0
    %p118 = por %p116, %p117
    %p119 = scmp.ne.s32.totalorder %s111, %s113
    %p120 = scmp.eq.s32.totalorder %s19, 1
    %p121 = por %p119, %p120
    %p122 = scmp.ne.s32.totalorder %s113, %s114
    %p123 = scmp.eq.s32.totalorder %s19, 0
    %p124 = por %p122, %p123
    %p125 = scmp.ne.s32.totalorder %s113, %s114
    %p126 = scmp.eq.s32.totalorder %s20, 1
    %p127 = por %p125, %p126
    %p129 = scmp.ne.s32.totalorder %s114, %s128
    %p130 = scmp.eq.s32.totalorder %s20, 0
    %p131 = por %p129, %p130
    %s132 = ssub.s32 %s14, %s21
    %p133 = scmp.eq.s32.totalorder %s132, 0
    %s135 = sadd.s32 %s134, 1
    %s136 = scalar_select %p133, %s134, %s135
    %p139 = pneg %p133
    %p140 = scmp.eq.s32.totalorder %s14, 1
    %p141 = por %p139, %p140
    %p142 = scmp.ne.s32.totalorder %s134, %s137
    %p143 = scmp.eq.s32.totalorder %s14, 0
    %p144 = por %p142, %p143
    %p145 = scmp.ne.s32.totalorder %s134, %s137
    %p146 = scmp.eq.s32.totalorder %s19, 1
    %p147 = por %p145, %p146
    %p148 = scmp.ne.s32.totalorder %s137, %s138
    %p149 = scmp.eq.s32.totalorder %s19, 0
    %p150 = por %p148, %p149
    %p151 = scmp.ne.s32.totalorder %s137, %s138
    %p152 = scmp.eq.s32.totalorder %s20, 1
    %p153 = por %p151, %p152
    %p155 = scmp.ne.s32.totalorder %s138, %s154
    %p156 = scmp.eq.s32.totalorder %s20, 0
    %p157 = por %p155, %p156
    %s158 = ssub.s32 %s14, %s21
    %p159 = scmp.eq.s32.totalorder %s158, 0
    %s161 = sadd.s32 %s160, 1
    %s162 = scalar_select %p159, %s160, %s161
    %p165 = pneg %p159
    %p166 = scmp.eq.s32.totalorder %s14, 1
    %p167 = por %p165, %p166
    %p168 = scmp.ne.s32.totalorder %s160, %s163
    %p169 = scmp.eq.s32.totalorder %s14, 0
    %p170 = por %p168, %p169
    %p171 = scmp.ne.s32.totalorder %s160, %s163
    %p172 = scmp.eq.s32.totalorder %s19, 1
    %p173 = por %p171, %p172
    %p174 = scmp.ne.s32.totalorder %s163, %s164
    %p175 = scmp.eq.s32.totalorder %s19, 0
    %p176 = por %p174, %p175
    %p177 = scmp.ne.s32.totalorder %s163, %s164
    %p178 = scmp.eq.s32.totalorder %s20, 1
    %p179 = por %p177, %p178
    %p181 = scmp.ne.s32.totalorder %s164, %s180
    %p182 = scmp.eq.s32.totalorder %s20, 0
    %p183 = por %p181, %p182
    %s184 = ssub.s32 %s14, %s21
    %p185 = scmp.eq.s32.totalorder %s184, 0
    %s187 = sadd.s32 %s186, 1
    %s188 = scalar_select %p185, %s186, %s187
    %p191 = pneg %p185
    %p192 = scmp.eq.s32.totalorder %s14, 1
    %p193 = por %p191, %p192
    %p194 = scmp.ne.s32.totalorder %s186, %s189
    %p195 = scmp.eq.s32.totalorder %s14, 0
    %p196 = por %p194, %p195
    %p197 = scmp.ne.s32.totalorder %s186, %s189
    %p198 = scmp.eq.s32.totalorder %s19, 1
    %p199 = por %p197, %p198
    %p200 = scmp.ne.s32.totalorder %s189, %s190
    %p201 = scmp.eq.s32.totalorder %s19, 0
    %p202 = por %p200, %p201
    %p203 = scmp.ne.s32.totalorder %s189, %s190
    %p204 = scmp.eq.s32.totalorder %s20, 1
    %p205 = por %p203, %p204
    %p207 = scmp.ne.s32.totalorder %s190, %s206
    %p208 = scmp.eq.s32.totalorder %s20, 0
    %p209 = por %p207, %p208
    %p210 = scmp.le.s32.totalorder 1, %s14
    %p211 = scmp.lt.s32.totalorder %s14, 3
    %p212 = pnand %p210, %p211
    %p213 = pneg %p212
    // Predicated region
    $region9: #{encoder_forward.3} parent=5 // pred_check
      _
    $region10: #{encoder_forward.3} parent=5 // pred_check_branch
      %215 = sbr.rel (%p212) target = $region12
    $region11: #{encoder_forward.3} parent=5 // pred_region
      %s216 = ssub.s32 %s14, 1
      // Predicated region
      $region13: #{encoder_forward.3} parent=11 // pred_check
        %p217 = pneg %p61
      $region14: #{encoder_forward.3} parent=11 // pred_check_branch
        %219 = sbr.rel (%p217) target = $region16
      $region15: #{encoder_forward.3} parent=11 // pred_region
        _
      $region16: #{encoder_forward.3} parent=11 // pred_fallthru
        _
      // Predicated region
      $region17: #{encoder_forward.3} parent=11 // pred_check
        %p220 = pneg %p82
      $region18: #{encoder_forward.3} parent=11 // pred_check_branch
        %222 = sbr.rel (%p220) target = $region20
      $region19: #{encoder_forward.3} parent=11 // pred_region
        _
      $region20: #{encoder_forward.3} parent=11 // pred_fallthru
        _
      // Predicated region
      $region21: #{encoder_forward.3} parent=11 // pred_check
        %p223 = pneg %p103
      $region22: #{encoder_forward.3} parent=11 // pred_check_branch
        %225 = sbr.rel (%p223) target = $region24
      $region23: #{encoder_forward.3} parent=11 // pred_region
        _
      $region24: #{encoder_forward.3} parent=11 // pred_fallthru
        _
      // Predicated region
      $region25: #{encoder_forward.3} parent=11 // pred_check
        %p226 = pneg %p124
      $region26: #{encoder_forward.3} parent=11 // pred_check_branch
        %228 = sbr.rel (%p226) target = $region28
      $region27: #{encoder_forward.3} parent=11 // pred_region
        _
      $region28: #{encoder_forward.3} parent=11 // pred_fallthru
        _
    $region12: #{encoder_forward.3} parent=5 // pred_fallthru
      _
    %p229 = scmp.lt.s32.totalorder %s14, 2
    // Predicated region
    $region29: #{encoder_forward.3} parent=5 // pred_check
      %p230 = pneg %p229
    $region30: #{encoder_forward.3} parent=5 // pred_check_branch
      %232 = sbr.rel (%p230) target = $region32
    $region31: #{encoder_forward.3} parent=5 // pred_region
      // Predicated region
      $region33: #{encoder_forward.3} parent=31 // pred_check
        %p233 = pneg %p34
      $region34: #{encoder_forward.3} parent=31 // pred_check_branch
        %235 = sbr.rel (%p233) target = $region36
      $region35: #{encoder_forward.3} parent=31 // pred_region
        %p236 = scmp.lt.s32.totalorder %s14, 1
        %s237 = scalar_select %p236, %s14, 1
        %s238 = smul.addr %s237, 2
        %s239 = smul.addr %s238, 4
        %s240 = scalar_lea.vmem %s0, %s239
      $region36: #{encoder_forward.3} parent=31 // pred_fallthru
        _
    $region32: #{encoder_forward.3} parent=5 // pred_fallthru
      _
    %p241 = scmp.le.s32.totalorder 1, %s14
    %p242 = scmp.lt.s32.totalorder %s14, 3
    %p243 = pnand %p241, %p242
    %p244 = pneg %p243
    // Predicated region
    $region37: #{encoder_forward.3} parent=5 // pred_check
      _
    $region38: #{encoder_forward.3} parent=5 // pred_check_branch
      %246 = sbr.rel (%p243) target = $region40
    $region39: #{encoder_forward.3} parent=5 // pred_region
      %s247 = ssub.s32 %s14, 1
      %p248 = scmp.lt.s32.totalorder %s19, 1
      %s249 = scalar_select %p248, %s19, 1
      %s250 = smul.addr %s249, 2
      %s251 = smul.addr %s250, 4
      %s252 = scalar_lea.vmem %s0, %s251
      %p253 = pneg %p40
      %p254 = pneg %p37
      %p255 = pneg %p61
      %p256 = pneg %p58
      %p257 = pneg %p82
      %p258 = pneg %p79
      %p259 = pneg %p103
      %p260 = pneg %p100
      %p261 = pneg %p124
      %p262 = pneg %p121
      %p263 = pneg %p150
      %p264 = pneg %p147
      %p265 = scmp.lt.s32.totalorder %s19, 1
      %s266 = scalar_select %p265, %s19, 1
      %s267 = smul.addr %s266, 2
      %s268 = smul.addr %s267, 4
      %s269 = scalar_lea.vmem %s5, %s268
      %p270 = pneg %p176
      %p271 = pneg %p173
      %p272 = scmp.lt.s32.totalorder %s19, 1
      %s273 = scalar_select %p272, %s19, 1
      %s274 = smul.addr %s273, 8
      %s275 = scalar_lea.vmem %s6, %s274
      %p276 = pneg %p202
      %p277 = pneg %p199
      %p278 = scmp.lt.s32.totalorder %s19, 1
      %s279 = scalar_select %p278, %s19, 1
      %s280 = smul.addr %s279, 8
      %s281 = scalar_lea.vmem %s7, %s280
      %p282 = scmp.lt.s32.totalorder %s19, 1
      %s283 = scalar_select %p282, %s19, 1
      %s284 = smul.addr %s283, 2
      %s285 = smul.addr %s284, 4
      %s286 = scalar_lea.vmem %s0, %s285
      %p287 = scmp.lt.s32.totalorder %s19, 1
      %s288 = scalar_select %p287, %s19, 1
      %s289 = smul.addr %s288, 2
      %s290 = smul.addr %s289, 4
      %s291 = scalar_lea.vmem %s5, %s290
      %p292 = scmp.lt.s32.totalorder %s19, 1
      %s293 = scalar_select %p292, %s19, 1
      %s294 = smul.addr %s293, 8
      %s295 = scalar_lea.vmem %s6, %s294
      %p296 = scmp.lt.s32.totalorder %s19, 1
      %s297 = scalar_select %p296, %s19, 1
      %s298 = smul.addr %s297, 8
      %s299 = scalar_lea.vmem %s7, %s298
      %v301 = vld [vmem:[%s286] sm:$0xff]
      %v302 = vlaneseq
      %v303 = vand.u32 %v302, 127
      %v304 = vadd.s32 %v303, 128
      %v305 = vand.u32 %v303, 15
      %v306 = vand.u32 %v304, 15
      %v308 = vcombine.high %v301, %v301
      %310 = vrot.lane.b32.xlu0 %v301, 17
      %v311 = vpop.permute.xlu0 %310
      %312 = vrot.lane.b32.xlu0 %v308, 17
      %v313 = vpop.permute.xlu0 %312
      %vm314 = vcmp.lt.s32.totalorder %v303, 17
      %v315 = vsel %vm314, %v311, %v313
      %v316 = vsel %vm314, %v313, %v311
      %vm317 = vcmp.ge.s32.totalorder %v303, 16
      %vm318 = vcmp.ge.s32.totalorder %v304, 16
      %vm319 = vcmp.ge.s32.totalorder %v305, 1
      %vm320 = vcmp.ge.s32.totalorder %v306, 1
      %vm321 = vmand %vm317, %vm319
      %vm322 = vmand %vm318, %vm320
      %v323 = vsel %vm321, 1, 0
      %v324 = vsel %vm322, 1, 0
      %v325 = vcvt.s32.f32 %v323
      %v326 = vcvt.s32.f32 %v324
      %v327 = vmul.f32 %v316, %v325
      %v328 = vmul.f32 %v315, %v326
      %329 = vrot.lane.b32.xlu0 %v301, 16
      %v330 = vpop.permute.xlu0 %329
      %331 = vrot.lane.b32.xlu0 %v308, 16
      %v332 = vpop.permute.xlu0 %331
      %vm333 = vcmp.lt.s32.totalorder %v303, 16
      %v334 = vsel %vm333, %v330, %v332
      %v335 = vsel %vm333, %v332, %v330
      %v336 = vsel %vm317, 1, 0
      %v337 = vsel %vm318, 1, 0
      %v338 = vcvt.s32.f32 %v336
      %v339 = vcvt.s32.f32 %v337
      %v340 = vmul.f32 %v335, %v338
      %v341 = vmul.f32 %v334, %v339
      %342 = vrot.lane.b32.xlu0 %v301, 15
      %v343 = vpop.permute.xlu0 %342
      %344 = vrot.lane.b32.xlu0 %v308, 15
      %v345 = vpop.permute.xlu0 %344
      %vm346 = vcmp.lt.s32.totalorder %v303, 15
      %v347 = vsel %vm346, %v343, %v345
      %v348 = vsel %vm346, %v345, %v343
      %vm349 = vcmp.lt.s32.totalorder %v305, 15
      %vm350 = vcmp.lt.s32.totalorder %v306, 15
      %vm351 = vmand %vm317, %vm349
      %vm352 = vmand %vm318, %vm350
      %v353 = vsel %vm351, 1, 0
      %v354 = vsel %vm352, 1, 0
      %v355 = vcvt.s32.f32 %v353
      %v356 = vcvt.s32.f32 %v354
      %v357 = vmul.f32 %v348, %v355
      %v358 = vmul.f32 %v347, %v356
      %359 = vrot.lane.b32.xlu0 %v301, 1
      %v360 = vpop.permute.xlu0 %359
      %361 = vrot.lane.b32.xlu0 %v308, 1
      %v362 = vpop.permute.xlu0 %361
      %vm363 = vcmp.lt.s32.totalorder %v303, 1
      %v364 = vsel %vm363, %v360, %v362
      %v365 = vsel %vm363, %v362, %v360
      %v366 = vsel %vm319, 1, 0
      %v367 = vsel %vm320, 1, 0
      %v368 = vcvt.s32.f32 %v366
      %v369 = vcvt.s32.f32 %v367
      %v370 = vmul.f32 %v365, %v368
      %v371 = vmul.f32 %v364, %v369
      %372 = vrot.lane.b32.xlu0 %v301, 127
      %v373 = vpop.permute.xlu0 %372
      %374 = vrot.lane.b32.xlu0 %v308, 127
      %v375 = vpop.permute.xlu0 %374
      %vm376 = vcmp.lt.s32.totalorder %v303, 127
      %v377 = vsel %vm376, %v373, %v375
      %v378 = vsel %vm376, %v375, %v373
      %v379 = vsel %vm349, 1, 0
      %v380 = vsel %vm350, 1, 0
      %v381 = vcvt.s32.f32 %v379
      %v382 = vcvt.s32.f32 %v380
      %v383 = vmul.f32 %v377, %v381
      %v384 = vmul.f32 %v378, %v382
      %385 = vrot.lane.b32.xlu0 %v301, 113
      %v386 = vpop.permute.xlu0 %385
      %387 = vrot.lane.b32.xlu0 %v308, 113
      %v388 = vpop.permute.xlu0 %387
      %vm389 = vcmp.lt.s32.totalorder %v303, 113
      %v390 = vsel %vm389, %v386, %v388
      %v391 = vsel %vm389, %v388, %v386
      %vm392 = vcmp.lt.s32.totalorder %v303, 240
      %vm393 = vcmp.lt.s32.totalorder %v304, 240
      %vm394 = vmand %vm392, %vm319
      %vm395 = vmand %vm393, %vm320
      %v396 = vsel %vm394, 1, 0
      %v397 = vsel %vm395, 1, 0
      %v398 = vcvt.s32.f32 %v396
      %v399 = vcvt.s32.f32 %v397
      %v400 = vmul.f32 %v390, %v398
      %v401 = vmul.f32 %v391, %v399
      %402 = vrot.lane.b32.xlu0 %v301, 112
      %v403 = vpop.permute.xlu0 %402
      %404 = vrot.lane.b32.xlu0 %v308, 112
      %v405 = vpop.permute.xlu0 %404
      %vm406 = vcmp.lt.s32.totalorder %v303, 112
      %v407 = vsel %vm406, %v403, %v405
      %v408 = vsel %vm406, %v405, %v403
      %v409 = vsel %vm392, 1, 0
      %v410 = vsel %vm393, 1, 0
      %v411 = vcvt.s32.f32 %v409
      %v412 = vcvt.s32.f32 %v410
      %v413 = vmul.f32 %v407, %v411
      %v414 = vmul.f32 %v408, %v412
      %415 = vrot.lane.b32.xlu0 %v301, 111
      %v416 = vpop.permute.xlu0 %415
      %417 = vrot.lane.b32.xlu0 %v308, 111
      %v418 = vpop.permute.xlu0 %417
      %vm419 = vcmp.lt.s32.totalorder %v303, 111
      %v420 = vsel %vm419, %v416, %v418
      %v421 = vsel %vm419, %v418, %v416
      %vm422 = vmand %vm392, %vm349
      %vm423 = vmand %vm393, %vm350
      %v424 = vsel %vm422, 1, 0
      %v425 = vsel %vm423, 1, 0
      %v426 = vcvt.s32.f32 %v424
      %v427 = vcvt.s32.f32 %v425
      %v428 = vmul.f32 %v420, %v426
      %v429 = vmul.f32 %v421, %v427
      %v432 = vrot.slane %v340, 4
      %v433 = vrot.slane %v341, 4
      %v438 = vrot.slane %v370, 4
      %v439 = vrot.slane %v371, 4
      %v444 = vrot.slane %v383, 4
      %v445 = vrot.slane %v384, 4
      %v450 = vrot.slane %v413, 4
      %v451 = vrot.slane %v414, 4
      %vm454 = vcmask 1043456
      %v455 = vsel %vm454, %v327, %v432
      %v456 = vsel %vm454, %v328, %v433
      %v457 = vsel %vm454, %v357, %v438
      %v458 = vsel %vm454, %v358, %v439
      %v459 = vsel %vm454, %v301, %v444
      %v460 = vsel %vm454, %v308, %v445
      %v461 = vsel %vm454, %v400, %v450
      %v462 = vsel %vm454, %v401, %v451
      %v463 = vpack.c.bf16 %v457, %v455
      %v464 = vpack.c.bf16 %v458, %v456
      %v465 = vpack.c.bf16 %v461, %v459
      %v466 = vpack.c.bf16 %v462, %v460
      %v467 = vpack.c.bf16 %v428, %v428
      %v468 = vpack.c.bf16 %v429, %v429
      %v469 = vld [vmem:[%s3] sm:$0xf]
      %v470 = vld [vmem:[%s4] sm:$0xff]
      %472 = vset.pattern.permute.xlu0 0
      %473 = vperm.xlu0 %472, %v470
      %v474 = vpop.permute.xlu0 %473
      %vm476 = vcmask 293888
      %v478 = vsel %vm476, %v469, 0
      %vm480 = vcmask 1041408
      %v482 = vsel %vm480, %v467, 0
      %v485 = vsel %vm480, %v468, 0
      %487 = vmatprep.subr.bf16.mxu0 %v464
      %488 = vmatpush1.bf16.msra.mxu0 %v463
      %489 = vmatprep.subr.bf16.mxu0 %v466
      %490 = vmatpush1.bf16.msra.mxu0 %v465
      %491 = vmatprep.subr.bf16.mxu0 %v485
      %492 = vmatpush1.bf16.msra.mxu0 %v482
      %493 = vmatprep.subr.bf16.mxu0 0
      %494 = vmatpush1.bf16.msra.mxu0 0
      %495 = vmatprep.subr.bf16.mxu0 0
      %496 = vmatpush1.bf16.msra.mxu0 0
      %497 = vmatprep.subr.bf16.mxu0 0
      %498 = vmatpush1.bf16.msra.mxu0 0
      %499 = vmatprep.subr.bf16.mxu0 0
      %500 = vmatpush1.bf16.msra.mxu0 0
      %501 = vmatprep.subr.bf16.mxu0 0
      %502 = vmatpush1.bf16.msra.mxu0 0
      %503 = vmatprep.subr.bf16.mxu0 0
      %504 = vmatpush1.bf16.msra.mxu0 0
      %505 = vmatprep.subr.bf16.mxu0 0
      %506 = vmatpush1.bf16.msra.mxu0 0
      %507 = vmatprep.subr.bf16.mxu0 0
      %508 = vmatpush1.bf16.msra.mxu0 0
      %509 = vmatprep.subr.bf16.mxu0 0
      %510 = vmatpush1.bf16.msra.mxu0 0
      %511 = vmatprep.subr.bf16.mxu0 0
      %512 = vmatpush1.bf16.msra.mxu0 0
      %513 = vmatprep.subr.bf16.mxu0 0
      %514 = vmatpush1.bf16.msra.mxu0 0
      %515 = vmatprep.subr.bf16.mxu0 0
      %516 = vmatpush1.bf16.msra.mxu0 0
      %517 = vmatprep.subr.bf16.mxu0 0
      %518 = vmatpush1.bf16.msra.mxu0 0
      %519 = vmatprep.mubr.bf16.mxu0 0
      %520 = vmatmul.mubr.bf16.gmra.mrb[0].mxu0 %v478
      %v521 = vpop.f32.mrb[0].mxu0
      %v522 = vadd.f32 %v474, %v521
      %v523 = vpop.f32.mrb[0].mxu0
      %v524 = vadd.f32 %v474, %v523
      %v525 = vpop.f32.mrb[0].mxu0
      %v526 = vpop.f32.mrb[0].mxu0
      %527 = vdwg.mxu0
      %v528 = vpack.c.bf16 %v522, %v522
      %v529 = vpack.c.bf16 %v524, %v524
      %v532 = vunpack.c.l.b16 %v528
      %v533 = vunpack.c.l.b16 %v529
      %v534 = vpack.c.b16 %v533, %v532
      %536 = vst [vmem:[%s291] sm:$0xff] %v534
      %v537 = vadd.f32 %v522, %v524
      %538 = vadd.xlane.f32.xlu0 %v537
      %v539 = vpop.xlane.xlu0 %538
      %vm540 = vcmask 7168
      %541 = vst.msk [vmem:[%s295] sm:$0xff] %vm540, %v539
      %v542 = vmul.f32 %v522, %v522
      %v543 = vmul.f32 %v524, %v524
      %v544 = vadd.f32 %v542, %v543
      %545 = vadd.xlane.f32.xlu0 %v544
      %v546 = vpop.xlane.xlu0 %545
      %547 = vst.msk [vmem:[%s299] sm:$0xff] %vm540, %v546
      %p548 = scmp.lt.s32.totalorder %s19, 1
      %s549 = scalar_select %p548, %s19, 1
      %s550 = smul.addr %s549, 2
      %s551 = smul.addr %s550, 4
      %s552 = scalar_lea.vmem %s5, %s551
      %p553 = scmp.lt.s32.totalorder %s19, 1
      %s554 = scalar_select %p553, %s19, 1
      %s555 = smul.addr %s554, 8
      %s556 = scalar_lea.vmem %s6, %s555
      %p557 = scmp.lt.s32.totalorder %s19, 1
      %s558 = scalar_select %p557, %s19, 1
      %s559 = smul.addr %s558, 8
      %s560 = scalar_lea.vmem %s7, %s559
      // Predicated region
      $region41: #{encoder_forward.3} parent=39 // pred_check
        %p561 = pneg %p147
      $region42: #{encoder_forward.3} parent=39 // pred_check_branch
        %563 = sbr.rel (%p561) target = $region44
      $region43: #{encoder_forward.3} parent=39 // pred_region
        _
      $region44: #{encoder_forward.3} parent=39 // pred_fallthru
        _
      // Predicated region
      $region45: #{encoder_forward.3} parent=39 // pred_check
        %p564 = pneg %p173
      $region46: #{encoder_forward.3} parent=39 // pred_check_branch
        %566 = sbr.rel (%p564) target = $region48
      $region47: #{encoder_forward.3} parent=39 // pred_region
        _
      $region48: #{encoder_forward.3} parent=39 // pred_fallthru
        _
      // Predicated region
      $region49: #{encoder_forward.3} parent=39 // pred_check
        %p567 = pneg %p199
      $region50: #{encoder_forward.3} parent=39 // pred_check_branch
        %569 = sbr.rel (%p567) target = $region52
      $region51: #{encoder_forward.3} parent=39 // pred_region
        _
      $region52: #{encoder_forward.3} parent=39 // pred_fallthru
        _
    $region40: #{encoder_forward.3} parent=5 // pred_fallthru
      _
    %p570 = scmp.le.s32.totalorder 2, %s14
    // Predicated region
    $region53: #{encoder_forward.3} parent=5 // pred_check
      %p571 = pneg %p570
    $region54: #{encoder_forward.3} parent=5 // pred_check_branch
      %573 = sbr.rel (%p571) target = $region56
    $region55: #{encoder_forward.3} parent=5 // pred_region
      %s574 = ssub.s32 %s14, 2
      // Predicated region
      $region57: #{encoder_forward.3} parent=55 // pred_check
        %p575 = pneg %p153
      $region58: #{encoder_forward.3} parent=55 // pred_check_branch
        %577 = sbr.rel (%p575) target = $region60
      $region59: #{encoder_forward.3} parent=55 // pred_region
        %p578 = scmp.lt.s32.totalorder %s20, 1
        %s579 = scalar_select %p578, %s20, 1
        %s580 = smul.addr %s579, 2
        %s581 = smul.addr %s580, 4
        %s582 = scalar_lea.vmem %s5, %s581
      $region60: #{encoder_forward.3} parent=55 // pred_fallthru
        _
      // Predicated region
      $region61: #{encoder_forward.3} parent=55 // pred_check
        %p583 = pneg %p179
      $region62: #{encoder_forward.3} parent=55 // pred_check_branch
        %585 = sbr.rel (%p583) target = $region64
      $region63: #{encoder_forward.3} parent=55 // pred_region
        %p586 = scmp.lt.s32.totalorder %s20, 1
        %s587 = scalar_select %p586, %s20, 1
        %s588 = smul.addr %s587, 8
        %s589 = scalar_lea.vmem %s6, %s588
      $region64: #{encoder_forward.3} parent=55 // pred_fallthru
        _
      // Predicated region
      $region65: #{encoder_forward.3} parent=55 // pred_check
        %p590 = pneg %p205
      $region66: #{encoder_forward.3} parent=55 // pred_check_branch
        %592 = sbr.rel (%p590) target = $region68
      $region67: #{encoder_forward.3} parent=55 // pred_region
        %p593 = scmp.lt.s32.totalorder %s20, 1
        %s594 = scalar_select %p593, %s20, 1
        %s595 = smul.addr %s594, 8
        %s596 = scalar_lea.vmem %s7, %s595
      $region68: #{encoder_forward.3} parent=55 // pred_fallthru
        _
    $region56: #{encoder_forward.3} parent=5 // pred_fallthru
      _
  $region6: #{encoder_forward.3} parent=0 // loop_footer
    %s18 = sadd.s32 1, %s14
  $region7: #{encoder_forward.3} parent=0 // loop_footer_branch
    %13 = sbr.rel target = $region3
  $region8: #{encoder_forward.3} parent=0 // loop_exit
    _

// kernel: encoder_forward.5
$region0: #{encoder_forward.5}
  #allocation0 [shape = 'u32[]', space=smem, size = 0x4, offset = 0x4, fixed_abs, tag = 'smem constant byte address 0x4 - core index']
  #allocation1 [shape = 'u32[144,128]{1,0:T(1,128)}', space=vmem, size = 0x12000, scoped, tag = 'internal scratch']
  %s0 = inlined_call_operand.vmem [shape: bf16[2,8,256], index: 0, kind: input, shape index: {}]
  %s1 = inlined_call_operand.vmem [shape: f32[8,1], index: 1, kind: input, shape index: {}]
  %s2 = inlined_call_operand.vmem [shape: f32[8,1], index: 2, kind: input, shape index: {}]
  %s3 = inlined_call_operand.vmem [shape: f32[256,64], index: 3, kind: input, shape index: {}]
  %s4 = inlined_call_operand.vmem [shape: f32[2,8,256], index: 4, kind: output, shape index: {0}]
  %s5 = inlined_call_operand.vmem [shape: f32[2,8,64], index: 5, kind: output, shape index: {1}]
  %6 = xla_tuple %s4, %s5
  %s7 = sld [smem:[#allocation0]]
  $region57: #{encoder_forward.5} parent=0
    _
  %s9 = ssub.s32 1, %s7
  %s10 = scalar_select 0, %s9, %s7
  loop: start=0, step=1, limit=4
  $region2: #{encoder_forward.5} parent=0 // loop_pre_header
    _
  $region3: #{encoder_forward.5} parent=0 // loop_header
    %s12 = sphi 0, %s16
    %p13 = scmp.ge.s32.totalorder %s12, 4
    %s22 = sphi 0, %s24
    %s25 = sphi 0, %s22
    %s26 = sphi 0, %s25
    %s42 = sphi 0, %s26
    %s46 = sphi 0, %s46
    %s48 = sphi 0, %s46
    %s49 = sphi 0, %s48
    %s63 = sphi 0, %s49
    %s67 = sphi 0, %s67
    %s69 = sphi 0, %s67
    %s70 = sphi 0, %s69
    %s84 = sphi 0, %s70
    %s88 = sphi 0, %s88
    %s90 = sphi 0, %s88
    %s91 = sphi 0, %s90
    %s105 = sphi 0, %s91
    %s111 = sphi 0, %s113
    %s114 = sphi 0, %s111
    %s115 = sphi 0, %s114
    %s131 = sphi 0, %s115
    %s137 = sphi 0, %s139
    %s140 = sphi 0, %s137
    %s141 = sphi 0, %s140
    %s157 = sphi 0, %s141
  $region4: #{encoder_forward.5} parent=0 // loop_header_branch
    %15 = sbr.rel (%p13) target = $region8
  $region5: #{encoder_forward.5} parent=0 // loop_body
    %s17 = ssub.s32 %s12, 1
    %s18 = ssub.s32 %s12, 2
    %s19 = sadd.s32 %s12, 1
    %s20 = ssub.s32 %s12, %s19
    %p21 = scmp.eq.s32.totalorder %s20, 0
    %s23 = sadd.s32 %s22, 1
    %s24 = scalar_select %p21, %s22, %s23
    %p27 = pneg %p21
    %p28 = scmp.eq.s32.totalorder %s12, 1
    %p29 = por %p27, %p28
    %p30 = scmp.ne.s32.totalorder %s22, %s25
    %p31 = scmp.eq.s32.totalorder %s12, 0
    %p32 = por %p30, %p31
    %p33 = scmp.ne.s32.totalorder %s22, %s25
    %p34 = scmp.eq.s32.totalorder %s17, 1
    %p35 = por %p33, %p34
    %p36 = scmp.ne.s32.totalorder %s25, %s26
    %p37 = scmp.eq.s32.totalorder %s17, 0
    %p38 = por %p36, %p37
    %p39 = scmp.ne.s32.totalorder %s25, %s26
    %p40 = scmp.eq.s32.totalorder %s18, 1
    %p41 = por %p39, %p40
    %p43 = scmp.ne.s32.totalorder %s26, %s42
    %p44 = scmp.eq.s32.totalorder %s18, 0
    %p45 = por %p43, %p44
    %s47 = sadd.s32 %s46, 1
    %p50 = scmp.eq.s32.totalorder %s12, 1
    %p51 = scmp.ne.s32.totalorder %s46, %s48
    %p52 = scmp.eq.s32.totalorder %s12, 0
    %p53 = por %p51, %p52
    %p54 = scmp.ne.s32.totalorder %s46, %s48
    %p55 = scmp.eq.s32.totalorder %s17, 1
    %p56 = por %p54, %p55
    %p57 = scmp.ne.s32.totalorder %s48, %s49
    %p58 = scmp.eq.s32.totalorder %s17, 0
    %p59 = por %p57, %p58
    %p60 = scmp.ne.s32.totalorder %s48, %s49
    %p61 = scmp.eq.s32.totalorder %s18, 1
    %p62 = por %p60, %p61
    %p64 = scmp.ne.s32.totalorder %s49, %s63
    %p65 = scmp.eq.s32.totalorder %s18, 0
    %p66 = por %p64, %p65
    %s68 = sadd.s32 %s67, 1
    %p71 = scmp.eq.s32.totalorder %s12, 1
    %p72 = scmp.ne.s32.totalorder %s67, %s69
    %p73 = scmp.eq.s32.totalorder %s12, 0
    %p74 = por %p72, %p73
    %p75 = scmp.ne.s32.totalorder %s67, %s69
    %p76 = scmp.eq.s32.totalorder %s17, 1
    %p77 = por %p75, %p76
    %p78 = scmp.ne.s32.totalorder %s69, %s70
    %p79 = scmp.eq.s32.totalorder %s17, 0
    %p80 = por %p78, %p79
    %p81 = scmp.ne.s32.totalorder %s69, %s70
    %p82 = scmp.eq.s32.totalorder %s18, 1
    %p83 = por %p81, %p82
    %p85 = scmp.ne.s32.totalorder %s70, %s84
    %p86 = scmp.eq.s32.totalorder %s18, 0
    %p87 = por %p85, %p86
    %s89 = sadd.s32 %s88, 1
    %p92 = scmp.eq.s32.totalorder %s12, 1
    %p93 = scmp.ne.s32.totalorder %s88, %s90
    %p94 = scmp.eq.s32.totalorder %s12, 0
    %p95 = por %p93, %p94
    %p96 = scmp.ne.s32.totalorder %s88, %s90
    %p97 = scmp.eq.s32.totalorder %s17, 1
    %p98 = por %p96, %p97
    %p99 = scmp.ne.s32.totalorder %s90, %s91
    %p100 = scmp.eq.s32.totalorder %s17, 0
    %p101 = por %p99, %p100
    %p102 = scmp.ne.s32.totalorder %s90, %s91
    %p103 = scmp.eq.s32.totalorder %s18, 1
    %p104 = por %p102, %p103
    %p106 = scmp.ne.s32.totalorder %s91, %s105
    %p107 = scmp.eq.s32.totalorder %s18, 0
    %p108 = por %p106, %p107
    %s109 = ssub.s32 %s12, %s19
    %p110 = scmp.eq.s32.totalorder %s109, 0
    %s112 = sadd.s32 %s111, 1
    %s113 = scalar_select %p110, %s111, %s112
    %p116 = pneg %p110
    %p117 = scmp.eq.s32.totalorder %s12, 1
    %p118 = por %p116, %p117
    %p119 = scmp.ne.s32.totalorder %s111, %s114
    %p120 = scmp.eq.s32.totalorder %s12, 0
    %p121 = por %p119, %p120
    %p122 = scmp.ne.s32.totalorder %s111, %s114
    %p123 = scmp.eq.s32.totalorder %s17, 1
    %p124 = por %p122, %p123
    %p125 = scmp.ne.s32.totalorder %s114, %s115
    %p126 = scmp.eq.s32.totalorder %s17, 0
    %p127 = por %p125, %p126
    %p128 = scmp.ne.s32.totalorder %s114, %s115
    %p129 = scmp.eq.s32.totalorder %s18, 1
    %p130 = por %p128, %p129
    %p132 = scmp.ne.s32.totalorder %s115, %s131
    %p133 = scmp.eq.s32.totalorder %s18, 0
    %p134 = por %p132, %p133
    %s135 = ssub.s32 %s12, %s19
    %p136 = scmp.eq.s32.totalorder %s135, 0
    %s138 = sadd.s32 %s137, 1
    %s139 = scalar_select %p136, %s137, %s138
    %p142 = pneg %p136
    %p143 = scmp.eq.s32.totalorder %s12, 1
    %p144 = por %p142, %p143
    %p145 = scmp.ne.s32.totalorder %s137, %s140
    %p146 = scmp.eq.s32.totalorder %s12, 0
    %p147 = por %p145, %p146
    %p148 = scmp.ne.s32.totalorder %s137, %s140
    %p149 = scmp.eq.s32.totalorder %s17, 1
    %p150 = por %p148, %p149
    %p151 = scmp.ne.s32.totalorder %s140, %s141
    %p152 = scmp.eq.s32.totalorder %s17, 0
    %p153 = por %p151, %p152
    %p154 = scmp.ne.s32.totalorder %s140, %s141
    %p155 = scmp.eq.s32.totalorder %s18, 1
    %p156 = por %p154, %p155
    %p158 = scmp.ne.s32.totalorder %s141, %s157
    %p159 = scmp.eq.s32.totalorder %s18, 0
    %p160 = por %p158, %p159
    %p161 = scmp.le.s32.totalorder 1, %s12
    %p162 = scmp.lt.s32.totalorder %s12, 3
    %p163 = pnand %p161, %p162
    %p164 = pneg %p163
    // Predicated region
    $region9: #{encoder_forward.5} parent=5 // pred_check
      _
    $region10: #{encoder_forward.5} parent=5 // pred_check_branch
      %166 = sbr.rel (%p163) target = $region12
    $region11: #{encoder_forward.5} parent=5 // pred_region
      %s167 = ssub.s32 %s12, 1
      // Predicated region
      $region13: #{encoder_forward.5} parent=11 // pred_check
        %p168 = pneg %p59
      $region14: #{encoder_forward.5} parent=11 // pred_check_branch
        %170 = sbr.rel (%p168) target = $region16
      $region15: #{encoder_forward.5} parent=11 // pred_region
        _
      $region16: #{encoder_forward.5} parent=11 // pred_fallthru
        _
      // Predicated region
      $region17: #{encoder_forward.5} parent=11 // pred_check
        %p171 = pneg %p80
      $region18: #{encoder_forward.5} parent=11 // pred_check_branch
        %173 = sbr.rel (%p171) target = $region20
      $region19: #{encoder_forward.5} parent=11 // pred_region
        _
      $region20: #{encoder_forward.5} parent=11 // pred_fallthru
        _
      // Predicated region
      $region21: #{encoder_forward.5} parent=11 // pred_check
        %p174 = pneg %p101
      $region22: #{encoder_forward.5} parent=11 // pred_check_branch
        %176 = sbr.rel (%p174) target = $region24
      $region23: #{encoder_forward.5} parent=11 // pred_region
        _
      $region24: #{encoder_forward.5} parent=11 // pred_fallthru
        _
    $region12: #{encoder_forward.5} parent=5 // pred_fallthru
      _
    %p177 = scmp.lt.s32.totalorder %s12, 2
    // Predicated region
    $region25: #{encoder_forward.5} parent=5 // pred_check
      %p178 = pneg %p177
    $region26: #{encoder_forward.5} parent=5 // pred_check_branch
      %180 = sbr.rel (%p178) target = $region28
    $region27: #{encoder_forward.5} parent=5 // pred_region
      // Predicated region
      $region29: #{encoder_forward.5} parent=27 // pred_check
        %p181 = pneg %p32
      $region30: #{encoder_forward.5} parent=27 // pred_check_branch
        %183 = sbr.rel (%p181) target = $region32
      $region31: #{encoder_forward.5} parent=27 // pred_region
        %p184 = scmp.lt.s32.totalorder %s12, 1
        %s185 = scalar_select %p184, %s12, 1
        %s186 = smul.addr %s185, 2
        %s187 = smul.addr %s186, 4
        %s188 = scalar_lea.vmem %s0, %s187
      $region32: #{encoder_forward.5} parent=27 // pred_fallthru
        _
    $region28: #{encoder_forward.5} parent=5 // pred_fallthru
      _
    %p189 = scmp.le.s32.totalorder 1, %s12
    %p190 = scmp.lt.s32.totalorder %s12, 3
    %p191 = pnand %p189, %p190
    %p192 = pneg %p191
    // Predicated region
    $region33: #{encoder_forward.5} parent=5 // pred_check
      _
    $region34: #{encoder_forward.5} parent=5 // pred_check_branch
      %194 = sbr.rel (%p191) target = $region36
    $region35: #{encoder_forward.5} parent=5 // pred_region
      %s195 = ssub.s32 %s12, 1
      %p196 = scmp.lt.s32.totalorder %s17, 1
      %s197 = scalar_select %p196, %s17, 1
      %s198 = smul.addr %s197, 2
      %s199 = smul.addr %s198, 4
      %s200 = scalar_lea.vmem %s0, %s199
      %p201 = pneg %p38
      %p202 = pneg %p35
      %p203 = pneg %p59
      %p204 = pneg %p56
      %p205 = pneg %p80
      %p206 = pneg %p77
      %p207 = pneg %p101
      %p208 = pneg %p98
      %p209 = pneg %p127
      %p210 = pneg %p124
      %p211 = scmp.lt.s32.totalorder %s17, 1
      %s212 = scalar_select %p211, %s17, 1
      %s213 = smul.addr %s212, 2
      %s214 = smul.addr %s213, 8
      %s215 = scalar_lea.vmem %s4, %s214
      %p216 = pneg %p153
      %p217 = pneg %p150
      %p218 = scmp.lt.s32.totalorder %s17, 1
      %s219 = scalar_select %p218, %s17, 1
      %s220 = smul.addr %s219, 8
      %s221 = scalar_lea.vmem %s5, %s220
      %p222 = scmp.lt.s32.totalorder %s17, 1
      %s223 = scalar_select %p222, %s17, 1
      %s224 = smul.addr %s223, 2
      %s225 = smul.addr %s224, 4
      %s226 = scalar_lea.vmem %s0, %s225
      %p227 = scmp.lt.s32.totalorder %s17, 1
      %s228 = scalar_select %p227, %s17, 1
      %s229 = smul.addr %s228, 2
      %s230 = smul.addr %s229, 8
      %s231 = scalar_lea.vmem %s4, %s230
      %p232 = scmp.lt.s32.totalorder %s17, 1
      %s233 = scalar_select %p232, %s17, 1
      %s234 = smul.addr %s233, 8
      %s235 = scalar_lea.vmem %s5, %s234
      %v236 = vld [vmem:[%s226] sm:$0xff]
      %v237 = vunpack.c.l.bf16 %v236
      %v238 = vunpack.c.h.bf16 %v236
      %v239 = vld [vmem:[%s1] sm:$0xff]
      %241 = vset.pattern.permute.xlu0 0
      %242 = vperm.xlu0 %241, %v239
      %v243 = vpop.permute.xlu0 %242
      %v245 = vmul.f32 %v237, %v243
      %v246 = vmul.f32 %v238, %v243
      %v247 = vld [vmem:[%s2] sm:$0xff]
      %249 = vset.pattern.permute.xlu0 0
      %250 = vperm.xlu0 %249, %v247
      %v251 = vpop.permute.xlu0 %250
      %v253 = vadd.f32 %v245, %v251
      %v254 = vadd.f32 %v246, %v251
      %v255 = vmax.f32 %v253, 0.0
      %v256 = vmax.f32 %v254, 0.0
      %257 = vst [vmem:[%s231] sm:$0xff] %v255
      %258 = vst [vmem:[%s231 + $0x8] sm:$0xff] %v256
      %259 = vrot.lane.b32.xlu0 %v255, 127
      %v260 = vpop.permute.xlu0 %259
      %261 = vrot.lane.b32.xlu0 %v256, 127
      %v262 = vpop.permute.xlu0 %261
      %v263 = vlaneseq
      %v264 = vand.u32 %v263, 127
      %vm265 = vcmp.lt.s32.totalorder %v264, 127
      %v266 = vsel %vm265, %v260, %v262
      %v267 = vsel %vm265, %v262, %v260
      %v268 = vmax.f32 %v255, %v266
      %v269 = vmax.f32 %v256, %v267
      %270 = vrot.lane.b32.xlu0 %v268, 112
      %v271 = vpop.permute.xlu0 %270
      %272 = vrot.lane.b32.xlu0 %v269, 112
      %v273 = vpop.permute.xlu0 %272
      %vm274 = vcmp.lt.s32.totalorder %v264, 112
      %v275 = vsel %vm274, %v271, %v273
      %v276 = vsel %vm274, %v273, %v271
      %v277 = vmax.f32 %v268, %v275
      %v278 = vmax.f32 %v269, %v276
      %v279 = vld [vmem:[%s3] sm:$0xff]
      %v280 = vld [vmem:[%s3 + $0x8] sm:$0xff]
      %v281 = vld [vmem:[%s3 + $0x10] sm:$0xff]
      %v282 = vld [vmem:[%s3 + $0x18] sm:$0xff]
      %v283 = vld [vmem:[%s3 + $0x20] sm:$0xff]
      %v284 = vld [vmem:[%s3 + $0x28] sm:$0xff]
      %v285 = vld [vmem:[%s3 + $0x30] sm:$0xff]
      %v286 = vld [vmem:[%s3 + $0x38] sm:$0xff]
      %v287 = vld [vmem:[%s3 + $0x40] sm:$0xff]
      %v288 = vld [vmem:[%s3 + $0x48] sm:$0xff]
      %v289 = vld [vmem:[%s3 + $0x50] sm:$0xff]
      %v290 = vld [vmem:[%s3 + $0x58] sm:$0xff]
      %v291 = vld [vmem:[%s3 + $0x60] sm:$0xff]
      %v292 = vld [vmem:[%s3 + $0x68] sm:$0xff]
      %v293 = vld [vmem:[%s3 + $0x70] sm:$0xff]
      %v294 = vld [vmem:[%s3 + $0x78] sm:$0xff]
      %v295 = vld [vmem:[%s3 + $0x80] sm:$0xff]
      %v296 = vld [vmem:[%s3 + $0x88] sm:$0xff]
      %v297 = vld [vmem:[%s3 + $0x90] sm:$0xff]
      %v298 = vld [vmem:[%s3 + $0x98] sm:$0xff]
      %v299 = vld [vmem:[%s3 + $0xa0] sm:$0xff]
      %v300 = vld [vmem:[%s3 + $0xa8] sm:$0xff]
      %v301 = vld [vmem:[%s3 + $0xb0] sm:$0xff]
      %v302 = vld [vmem:[%s3 + $0xb8] sm:$0xff]
      %v303 = vld [vmem:[%s3 + $0xc0] sm:$0xff]
      %v304 = vld [vmem:[%s3 + $0xc8] sm:$0xff]
      %v305 = vld [vmem:[%s3 + $0xd0] sm:$0xff]
      %v306 = vld [vmem:[%s3 + $0xd8] sm:$0xff]
      %v307 = vld [vmem:[%s3 + $0xe0] sm:$0xff]
      %v308 = vld [vmem:[%s3 + $0xe8] sm:$0xff]
      %v309 = vld [vmem:[%s3 + $0xf0] sm:$0xff]
      %v310 = vld [vmem:[%s3 + $0xf8] sm:$0xff]
      %311 = vmatprep.subr.mxu0 0.0
      %312 = vmatpush1.msra.mxu0 %v279
      %313 = vmatprep.subr.mxu0 0.0
      %314 = vmatpush1.msra.mxu0 %v280
      %315 = vmatprep.subr.mxu0 0.0
      %316 = vmatpush1.msra.mxu0 %v281
      %317 = vmatprep.subr.mxu0 0.0
      %318 = vmatpush1.msra.mxu0 %v282
      %319 = vmatprep.subr.mxu0 0.0
      %320 = vmatpush1.msra.mxu0 %v283
      %321 = vmatprep.subr.mxu0 0.0
      %322 = vmatpush1.msra.mxu0 %v284
      %323 = vmatprep.subr.mxu0 0.0
      %324 = vmatpush1.msra.mxu0 %v285
      %325 = vmatprep.subr.mxu0 0.0
      %326 = vmatpush1.msra.mxu0 %v286
      %327 = vmatprep.subr.mxu0 0.0
      %328 = vmatpush1.msra.mxu0 %v287
      %329 = vmatprep.subr.mxu0 0.0
      %330 = vmatpush1.msra.mxu0 %v288
      %331 = vmatprep.subr.mxu0 0.0
      %332 = vmatpush1.msra.mxu0 %v289
      %333 = vmatprep.subr.mxu0 0.0
      %334 = vmatpush1.msra.mxu0 %v290
      %335 = vmatprep.subr.mxu0 0.0
      %336 = vmatpush1.msra.mxu0 %v291
      %337 = vmatprep.subr.mxu0 0.0
      %338 = vmatpush1.msra.mxu0 %v292
      %339 = vmatprep.subr.mxu0 0.0
      %340 = vmatpush1.msra.mxu0 %v293
      %341 = vmatprep.subr.mxu0 0.0
      %342 = vmatpush1.msra.mxu0 %v294
      %343 = vmatprep.subr.mxu0 0.0
      %344 = vmatpush1.msra.mxu0 %v295
      %345 = vmatprep.subr.mxu0 0.0
      %346 = vmatpush1.msra.mxu0 %v296
      %347 = vmatprep.subr.mxu0 0.0
      %348 = vmatpush1.msra.mxu0 %v297
      %349 = vmatprep.subr.mxu0 0.0
      %350 = vmatpush1.msra.mxu0 %v298
      %351 = vmatprep.subr.mxu0 0.0
      %352 = vmatpush1.msra.mxu0 %v299
      %353 = vmatprep.subr.mxu0 0.0
      %354 = vmatpush1.msra.mxu0 %v300
      %355 = vmatprep.subr.mxu0 0.0
      %356 = vmatpush1.msra.mxu0 %v301
      %357 = vmatprep.subr.mxu0 0.0
      %358 = vmatpush1.msra.mxu0 %v302
      %359 = vmatprep.subr.mxu0 0.0
      %360 = vmatpush1.msra.mxu0 %v303
      %361 = vmatprep.subr.mxu0 0.0
      %362 = vmatpush1.msra.mxu0 %v304
      %363 = vmatprep.subr.mxu0 0.0
      %364 = vmatpush1.msra.mxu0 %v305
      %365 = vmatprep.subr.mxu0 0.0
      %366 = vmatpush1.msra.mxu0 %v306
      %367 = vmatprep.subr.mxu0 0.0
      %368 = vmatpush1.msra.mxu0 %v307
      %369 = vmatprep.subr.mxu0 0.0
      %370 = vmatpush1.msra.mxu0 %v308
      %371 = vmatprep.subr.mxu0 0.0
      %372 = vmatpush1.msra.mxu0 %v309
      %373 = vmatprep.subr.mxu0 0.0
      %374 = vmatpush1.msra.mxu0 %v310
      %375 = vmatprep.mubr.f32.mxu0 %v278
      %376 = vmatmul.mubr.f32.gmra.mrb[0].mxu0 %v277
      %v377 = vpop.f32.mrb[0].mxu0
      %v378 = vadd.f32 0.0, %v377
      %v379 = vpop.f32.mrb[0].mxu0
      %380 = vdwg.mxu0
      %vm381 = vcmask 523264
      %382 = vst.msk [vmem:[%s235] sm:$0xff] %vm381, %v378
      %p383 = scmp.lt.s32.totalorder %s17, 1
      %s384 = scalar_select %p383, %s17, 1
      %s385 = smul.addr %s384, 2
      %s386 = smul.addr %s385, 8
      %s387 = scalar_lea.vmem %s4, %s386
      %p388 = scmp.lt.s32.totalorder %s17, 1
      %s389 = scalar_select %p388, %s17, 1
      %s390 = smul.addr %s389, 8
      %s391 = scalar_lea.vmem %s5, %s390
      // Predicated region
      $region37: #{encoder_forward.5} parent=35 // pred_check
        %p392 = pneg %p124
      $region38: #{encoder_forward.5} parent=35 // pred_check_branch
        %394 = sbr.rel (%p392) target = $region40
      $region39: #{encoder_forward.5} parent=35 // pred_region
        _
      $region40: #{encoder_forward.5} parent=35 // pred_fallthru
        _
      // Predicated region
      $region41: #{encoder_forward.5} parent=35 // pred_check
        %p395 = pneg %p150
      $region42: #{encoder_forward.5} parent=35 // pred_check_branch
        %397 = sbr.rel (%p395) target = $region44
      $region43: #{encoder_forward.5} parent=35 // pred_region
        _
      $region44: #{encoder_forward.5} parent=35 // pred_fallthru
        _
    $region36: #{encoder_forward.5} parent=5 // pred_fallthru
      _
    %p398 = scmp.le.s32.totalorder 2, %s12
    // Predicated region
    $region45: #{encoder_forward.5} parent=5 // pred_check
      %p399 = pneg %p398
    $region46: #{encoder_forward.5} parent=5 // pred_check_branch
      %401 = sbr.rel (%p399) target = $region48
    $region47: #{encoder_forward.5} parent=5 // pred_region
      %s402 = ssub.s32 %s12, 2
      // Predicated region
      $region49: #{encoder_forward.5} parent=47 // pred_check
        %p403 = pneg %p130
      $region50: #{encoder_forward.5} parent=47 // pred_check_branch
        %405 = sbr.rel (%p403) target = $region52
      $region51: #{encoder_forward.5} parent=47 // pred_region
        %p406 = scmp.lt.s32.totalorder %s18, 1
        %s407 = scalar_select %p406, %s18, 1
        %s408 = smul.addr %s407, 2
        %s409 = smul.addr %s408, 8
        %s410 = scalar_lea.vmem %s4, %s409
      $region52: #{encoder_forward.5} parent=47 // pred_fallthru
        _
      // Predicated region
      $region53: #{encoder_forward.5} parent=47 // pred_check
        %p411 = pneg %p156
      $region54: #{encoder_forward.5} parent=47 // pred_check_branch
        %413 = sbr.rel (%p411) target = $region56
      $region55: #{encoder_forward.5} parent=47 // pred_region
        %p414 = scmp.lt.s32.totalorder %s18, 1
        %s415 = scalar_select %p414, %s18, 1
        %s416 = smul.addr %s415, 8
        %s417 = scalar_lea.vmem %s5, %s416
      $region56: #{encoder_forward.5} parent=47 // pred_fallthru
        _
    $region48: #{encoder_forward.5} parent=5 // pred_fallthru
      _
  $region6: #{encoder_forward.5} parent=0 // loop_footer
    %s16 = sadd.s32 1, %s12
  $region7: #{encoder_forward.5} parent=0 // loop_footer_branch
    %11 = sbr.rel target = $region3
  $region8: #{encoder_forward.5} parent=0 // loop_exit
    _

</llo_original>
